<compile_context>
chip_gen: v5e
topology: v5e:2x2
jax: 0.10.0
libtpu: 0.0.40
codegen_flags: <defaults>
</compile_context>

<pallas_src>
import math
import functools

import jax
import jax.numpy as jnp
from jax.experimental import pallas as pl
from jax.experimental.pallas import tpu as pltpu


_MXU_DTYPE = jnp.bfloat16            # MXU operand dtype (accumulation is f32)
_VMEM_LIMIT = 32 * 1024 * 1024       # safe on v5e/v6e/v7x
_MASK_NEG = jnp.float32(-1e9)        # finite masking sentinel


def _tile(dim, target, align):
    """Largest `align`-multiple <= target that divides `dim`, else full dim."""
    if dim <= target:
        return dim
    t = (target // align) * align
    while t >= align:
        if dim % t == 0:
            return t
        t -= align
    return dim


# ---------------------------------------------------------------------------
# Kernel 1: tiled GEMM  y = x @ w_t + b   (optional ReLU)
# ---------------------------------------------------------------------------
def _linear_kernel(x_ref, w_ref, b_ref, o_ref, acc_ref, *, activation):
    @pl.when(pl.program_id(2) == 0)
    def _init():
        acc_ref[...] = jnp.zeros_like(acc_ref)

    acc_ref[...] += jnp.dot(x_ref[...].astype(_MXU_DTYPE),
                            w_ref[...].astype(_MXU_DTYPE),
                            preferred_element_type=jnp.float32)

    @pl.when(pl.program_id(2) == pl.num_programs(2) - 1)
    def _finalize():
        y = acc_ref[...] + b_ref[...]
        if activation == "relu":
            y = jnp.maximum(y, 0.0)
        o_ref[...] = y.astype(o_ref.dtype)


def linear(x, w_t, b, activation=None):
    """x: (M, K) f32, w_t: (K, Nout) bf16 (pre-transposed), b: (Nout,) f32."""
    M, K = x.shape
    Nout = w_t.shape[1]
    tm = _tile(M, 256, 8)
    tn = _tile(Nout, 256, 128)
    tk = _tile(K, 512, 128)
    grid = (M // tm, Nout // tn, K // tk)
    kernel = functools.partial(_linear_kernel, activation=activation)
    return pl.pallas_call(
        kernel,
        out_shape=jax.ShapeDtypeStruct((M, Nout), x.dtype),
        grid_spec=pltpu.PrefetchScalarGridSpec(
            num_scalar_prefetch=0,
            grid=grid,
            in_specs=[pl.BlockSpec((tm, tk), lambda i, j, k: (i, k)),
                      pl.BlockSpec((tk, tn), lambda i, j, k: (k, j)),
                      pl.BlockSpec((1, tn), lambda i, j, k: (0, j))],
            out_specs=pl.BlockSpec((tm, tn), lambda i, j, k: (i, j)),
            scratch_shapes=[pltpu.VMEM((tm, tn), jnp.float32)]),
        compiler_params=pltpu.CompilerParams(
            dimension_semantics=("parallel", "parallel", "arbitrary"),
            vmem_limit_bytes=_VMEM_LIMIT),
    )(x, w_t, b.reshape(1, Nout).astype(jnp.float32))


# ---------------------------------------------------------------------------
# Kernel 2: tiled GEMM with fused bias + residual-add + LayerNorm epilogue
#           (out-projection and FFN second linear)
# ---------------------------------------------------------------------------
def _linear_res_ln_kernel(x_ref, w_ref, b_ref, res_ref, g_ref, bt_ref,
                          o_ref, acc_ref):
    @pl.when(pl.program_id(1) == 0)
    def _init():
        acc_ref[...] = jnp.zeros_like(acc_ref)

    acc_ref[...] += jnp.dot(x_ref[...].astype(_MXU_DTYPE),
                            w_ref[...].astype(_MXU_DTYPE),
                            preferred_element_type=jnp.float32)

    @pl.when(pl.program_id(1) == pl.num_programs(1) - 1)
    def _finalize():
        s = acc_ref[...] + b_ref[...] + res_ref[...].astype(jnp.float32)
        mean = jnp.mean(s, axis=-1, keepdims=True)
        var = jnp.mean((s - mean) ** 2, axis=-1, keepdims=True)
        y = (s - mean) * jax.lax.rsqrt(var + 1e-5)
        o_ref[...] = (y * g_ref[...] + bt_ref[...]).astype(o_ref.dtype)


def linear_res_ln(x, w_t, b, residual, gamma, beta):
    """y = LayerNorm(residual + (x @ w_t + b)); x: (M, K), w_t: (K, E)."""
    M, K = x.shape
    E = w_t.shape[1]
    tm = _tile(M, 256, 8)
    tk = _tile(K, 512, 128)
    grid = (M // tm, K // tk)
    return pl.pallas_call(
        _linear_res_ln_kernel,
        out_shape=jax.ShapeDtypeStruct((M, E), x.dtype),
        grid_spec=pltpu.PrefetchScalarGridSpec(
            num_scalar_prefetch=0,
            grid=grid,
            in_specs=[pl.BlockSpec((tm, tk), lambda i, k: (i, k)),
                      pl.BlockSpec((tk, E), lambda i, k: (k, 0)),
                      pl.BlockSpec((1, E), lambda i, k: (0, 0)),
                      pl.BlockSpec((tm, E), lambda i, k: (i, 0)),
                      pl.BlockSpec((1, E), lambda i, k: (0, 0)),
                      pl.BlockSpec((1, E), lambda i, k: (0, 0))],
            out_specs=pl.BlockSpec((tm, E), lambda i, k: (i, 0)),
            scratch_shapes=[pltpu.VMEM((tm, E), jnp.float32)]),
        compiler_params=pltpu.CompilerParams(
            dimension_semantics=("parallel", "arbitrary"),
            vmem_limit_bytes=_VMEM_LIMIT),
    )(x, w_t, b.reshape(1, E).astype(jnp.float32), residual,
      gamma.reshape(1, E).astype(jnp.float32),
      beta.reshape(1, E).astype(jnp.float32))


# ---------------------------------------------------------------------------
# Kernel 3: multi-head attention, batch-major, grid=(batch, q-blocks).
# Heads are sliced on the lane axis inside the kernel (no XLA transposes);
# also emits the head-averaged attention-weight matrix.
# ---------------------------------------------------------------------------
def _mha_kernel(q_ref, k_ref, v_ref, m_ref, o_ref, w_ref, *, nheads):
    q = q_ref[0].astype(jnp.float32)     # (tq, E), q already pre-scaled
    k = k_ref[0].astype(jnp.float32)     # (S,  E)
    v = v_ref[0].astype(jnp.float32)     # (S,  E)
    mask = m_ref[0]                      # (1,  S) additive f32

    dh = q.shape[-1] // nheads
    inv_h = jnp.float32(1.0 / nheads)

    # TODO(synk): pack several heads per MXU call to lift the Dh=32
    # contracting-dim underutilization (blocked-diagonal QK^T).
    outs = []
    w_acc = jnp.zeros((q.shape[0], k.shape[0]), jnp.float32)
    for h in range(nheads):
        qh = q[:, h * dh:(h + 1) * dh].astype(_MXU_DTYPE)
        kh = k[:, h * dh:(h + 1) * dh].astype(_MXU_DTYPE)
        vh = v[:, h * dh:(h + 1) * dh].astype(_MXU_DTYPE)

        s = jax.lax.dot_general(qh, kh, (((1,), (1,)), ((), ())),
                                preferred_element_type=jnp.float32)  # (tq, S)
        s = s + mask
        m = jnp.max(s, axis=-1, keepdims=True)
        p = jnp.exp(s - m)
        p = p * pl.reciprocal(jnp.sum(p, axis=-1, keepdims=True), approx=True)

        outs.append(jnp.dot(p.astype(_MXU_DTYPE), vh,
                            preferred_element_type=jnp.float32))     # (tq, dh)
        w_acc = w_acc + p

    o_ref[0] = jnp.concatenate(outs, axis=-1).astype(o_ref.dtype)
    w_ref[0] = (w_acc * inv_h).astype(w_ref.dtype)


def mha(q, k, v, mask_add, nheads):
    """q: (N, L, E); k, v: (N, S, E); mask_add: (N, 1, S) additive f32."""
    N, L, E = q.shape
    S = k.shape[1]
    tq = _tile(L, 256, 8)
    grid = (N, L // tq)
    kernel = functools.partial(_mha_kernel, nheads=nheads)
    return pl.pallas_call(
        kernel,
        out_shape=(jax.ShapeDtypeStruct((N, L, E), q.dtype),
                   jax.ShapeDtypeStruct((N, L, S), jnp.float32)),
        grid_spec=pltpu.PrefetchScalarGridSpec(
            num_scalar_prefetch=0,
            grid=grid,
            in_specs=[pl.BlockSpec((1, tq, E), lambda b, i: (b, i, 0)),
                      pl.BlockSpec((1, S, E), lambda b, i: (b, 0, 0)),
                      pl.BlockSpec((1, S, E), lambda b, i: (b, 0, 0)),
                      pl.BlockSpec((1, 1, S), lambda b, i: (b, 0, 0))],
            out_specs=(pl.BlockSpec((1, tq, E), lambda b, i: (b, i, 0)),
                       pl.BlockSpec((1, tq, S), lambda b, i: (b, i, 0)))),
        compiler_params=pltpu.CompilerParams(
            dimension_semantics=("parallel", "parallel"),
            vmem_limit_bytes=_VMEM_LIMIT),
    )(q, k, v, mask_add)


# ---------------------------------------------------------------------------
# Decoder layer and full TransformerDecoder forward
# ---------------------------------------------------------------------------
def decoder_layer(x, k_mem, v_mem, mask_add, p, nhead, N, L, S, E):
    # q/k/v projections (1/sqrt(Dh) already folded into wq/bq)
    q = linear(x, p["wq_t"], p["bq"])
    k = linear(k_mem, p["wk_t"], p["bk"])
    v = linear(v_mem, p["wv_t"], p["bv"])

    attn, attn_w = mha(q.reshape(N, L, E), k.reshape(N, S, E),
                       v.reshape(N, S, E), mask_add, nhead)
    attn = attn.reshape(N * L, E)

    # out-projection + residual + LayerNorm1 (dropout1 = identity, eval mode)
    x = linear_res_ln(attn, p["wo_t"], p["bo"], x, p["ln1_g"], p["ln1_b"])
    # feed-forward: ReLU linear, then linear2 + residual + LayerNorm2 fused
    h = linear(x, p["w1_t"], p["b1"], activation="relu")
    x = linear_res_ln(h, p["w2_t"], p["b2"], x, p["ln2_g"], p["ln2_b"])
    return x, attn_w


@functools.partial(jax.jit, static_argnames=("nhead",))
def transformer_decoder(query, key, value, key_padding_mask, layer_params, nhead):
    L, N, E = query.shape
    S = key.shape[0]

    # Go batch-major once for the whole layer stack (single transpose in/out);
    # per-layer head transposes are eliminated (heads sliced inside the kernel).
    x = jnp.transpose(query, (1, 0, 2)).reshape(N * L, E)
    k_mem = jnp.transpose(key, (1, 0, 2)).reshape(N * S, E)
    v_mem = jnp.transpose(value, (1, 0, 2)).reshape(N * S, E)
    mask_add = jnp.where(key_padding_mask, _MASK_NEG,
                         jnp.float32(0.0)).reshape(N, 1, S)

    weights = []
    for p in layer_params:
        x, w = decoder_layer(x, k_mem, v_mem, mask_add, p, nhead, N, L, S, E)
        weights.append(w)

    out = x.reshape(N, L, E).transpose(1, 0, 2)          # back to (L, N, E)
    if weights:
        return out, jnp.stack(weights, axis=0)           # (num_layers, N, L, L)
    return out, None


# ---------------------------------------------------------------------------
# Parameter construction (PyTorch convention) + kernel-friendly preparation
# ---------------------------------------------------------------------------
def make_layer_params(key, embed_dim, dim_feedforward):
    E, F = embed_dim, dim_feedforward
    ks = jax.random.split(key, 8)
    s = 0.02
    return {
        "in_proj_w": s * jax.random.normal(ks[0], (3 * E, E), jnp.float32),
        "in_proj_b": s * jax.random.normal(ks[1], (3 * E,), jnp.float32),
        "out_proj_w": s * jax.random.normal(ks[2], (E, E), jnp.float32),
        "out_proj_b": s * jax.random.normal(ks[3], (E,), jnp.float32),
        "lin1_w": s * jax.random.normal(ks[4], (F, E), jnp.float32),
        "lin1_b": s * jax.random.normal(ks[5], (F,), jnp.float32),
        "lin2_w": s * jax.random.normal(ks[6], (E, F), jnp.float32),
        "lin2_b": s * jax.random.normal(ks[7], (E,), jnp.float32),
        "ln1_g": jnp.ones((E,), jnp.float32),
        "ln1_b": jnp.zeros((E,), jnp.float32),
        "ln2_g": jnp.ones((E,), jnp.float32),
        "ln2_b": jnp.zeros((E,), jnp.float32),
    }


def prepare_layer_params(p, nhead):
    """Transpose weights once to (K, Nout), cast the MXU operands to bf16 and
    fold 1/sqrt(Dh) into the q projection (all free at trace time)."""
    E = p["out_proj_w"].shape[0]
    scale = 1.0 / math.sqrt(E // nhead)
    wq, wk, wv = jnp.split(p["in_proj_w"], 3, axis=0)
    bq, bk, bv = jnp.split(p["in_proj_b"], 3, axis=0)
    cast = lambda w: w.astype(_MXU_DTYPE)
    return {
        "wq_t": cast((wq * scale).T), "bq": (bq * scale).astype(jnp.float32),
        "wk_t": cast(wk.T), "bk": bk,
        "wv_t": cast(wv.T), "bv": bv,
        "wo_t": cast(p["out_proj_w"].T), "bo": p["out_proj_b"],
        "w1_t": cast(p["lin1_w"].T), "b1": p["lin1_b"],
        "w2_t": cast(p["lin2_w"].T), "b2": p["lin2_b"],
        "ln1_g": p["ln1_g"], "ln1_b": p["ln1_b"],
        "ln2_g": p["ln2_g"], "ln2_b": p["ln2_b"],
    }


if __name__ == "__main__":
    # Small shapes consistent with the module: seq=8, batch=2, embed=128,
    # nhead=4, ffn=256, num_layers=2.
    L, N, E, H, F = 8, 2, 128, 4, 256
    NUM_LAYERS = 2

    root = jax.random.PRNGKey(0)
    k_q, k_k, k_v, k_p = jax.random.split(root, 4)
    query = jax.random.normal(k_q, (L, N, E), jnp.float32)
    key = jax.random.normal(k_k, (L, N, E), jnp.float32)
    value = jax.random.normal(k_v, (L, N, E), jnp.float32)
    # mask out the last two key positions of every batch element
    key_padding_mask = jnp.zeros((N, L), dtype=bool).at[:, -2:].set(True)

    layer_keys = jax.random.split(k_p, NUM_LAYERS)
    params = [prepare_layer_params(make_layer_params(k, E, F), H)
              for k in layer_keys]

    out, weights = transformer_decoder(query, key, value, key_padding_mask,
                                       params, nhead=H)
    jax.block_until_ready((out, weights))

    assert out.shape == (L, N, E)
    assert weights.shape == (NUM_LAYERS, N, L, L)
    assert bool(jnp.isfinite(out).all())
    assert bool(jnp.allclose(weights.sum(-1), 1.0, atol=1e-2))
    print("KERNEL_OK")
</pallas_src>

<mosaic_0001>
module attributes {stable_mosaic.version = 11 : i64} {
  func.func @_linear_kernel(%arg0: i32, %arg1: i32, %arg2: i32, %arg3: memref<16x128xf32, #tpu.memory_space<vmem>>, %arg4: memref<128x128xbf16, #tpu.memory_space<vmem>>, %arg5: memref<1x128xf32, #tpu.memory_space<vmem>>, %arg6: memref<16x128xf32, #tpu.memory_space<vmem>>, %arg7: memref<16x128xf32, #tpu.memory_space<vmem>>) attributes {dimension_semantics = [#tpu.dimension_semantics<parallel>, #tpu.dimension_semantics<parallel>, #tpu.dimension_semantics<arbitrary>], iteration_bounds = array<i64: 1, 1, 1>, scalar_prefetch = 0 : i64, scratch_operands = 1 : i64, tpu.core_type = #tpu.core_type<tc>, window_params = [{transform_indices = @transform_0, window_bounds = array<i64: 16, 128>}, {transform_indices = @transform_1, window_bounds = array<i64: 128, 128>}, {transform_indices = @transform_2, window_bounds = array<i64: 1, 128>}, {transform_indices = @transform_3, window_bounds = array<i64: 16, 128>}]} {
    %c0_i32 = arith.constant 0 : i32
    %0 = arith.cmpi eq, %arg2, %c0_i32 : i32
    %1 = arith.extui %0 : i1 to i32
    %c0_i32_0 = arith.constant 0 : i32
    %2 = arith.cmpi ne, %1, %c0_i32_0 : i32
    scf.if %2 {
      %cst_10 = arith.constant 0.000000e+00 : f32
      %13 = vector.broadcast %cst_10 : f32 to vector<16x128xf32>
      %c0_11 = arith.constant 0 : index
      %c0_12 = arith.constant 0 : index
      %14 = vector.load %arg7[%c0_11, %c0_12] : memref<16x128xf32, #tpu.memory_space<vmem>>, vector<16x128xf32>
      tpu.vector_store %arg7[%c0_11, %c0_12], %13 {strides = array<i32>} : memref<16x128xf32, #tpu.memory_space<vmem>>, vector<16x128xf32>,
    } else {
    }
    %c0 = arith.constant 0 : index
    %c0_1 = arith.constant 0 : index
    %3 = vector.load %arg7[%c0, %c0_1] : memref<16x128xf32, #tpu.memory_space<vmem>>, vector<16x128xf32>
    %c0_2 = arith.constant 0 : index
    %c0_3 = arith.constant 0 : index
    %4 = vector.load %arg3[%c0_2, %c0_3] : memref<16x128xf32, #tpu.memory_space<vmem>>, vector<16x128xf32>
    %5 = arith.truncf %4 : vector<16x128xf32> to vector<16x128xbf16>
    %c0_4 = arith.constant 0 : index
    %c0_5 = arith.constant 0 : index
    %6 = vector.load %arg4[%c0_4, %c0_5] : memref<128x128xbf16, #tpu.memory_space<vmem>>, vector<128x128xbf16>
    %cst = arith.constant dense<0.000000e+00> : vector<16x128xf32>
    %7 = tpu.matmul %5, %6, %cst {dimension_numbers = #tpu.dot_dimension_numbers<[1], [0], [0], [1], [0, 0, 1, 1], [], []>} : vector<16x128xbf16>, vector<128x128xbf16>, vector<16x128xf32> -> vector<16x128xf32>
    %8 = arith.addf %3, %7 : vector<16x128xf32>
    %c0_6 = arith.constant 0 : index
    %c0_7 = arith.constant 0 : index
    %9 = vector.load %arg7[%c0_6, %c0_7] : memref<16x128xf32, #tpu.memory_space<vmem>>, vector<16x128xf32>
    tpu.vector_store %arg7[%c0_6, %c0_7], %8 {strides = array<i32>} : memref<16x128xf32, #tpu.memory_space<vmem>>, vector<16x128xf32>,
    %c0_i32_8 = arith.constant 0 : i32
    %10 = arith.cmpi eq, %arg2, %c0_i32_8 : i32
    %11 = arith.extui %10 : i1 to i32
    %c0_i32_9 = arith.constant 0 : i32
    %12 = arith.cmpi ne, %11, %c0_i32_9 : i32
    scf.if %12 {
      %c0_10 = arith.constant 0 : index
      %c0_11 = arith.constant 0 : index
      %13 = vector.load %arg7[%c0_10, %c0_11] : memref<16x128xf32, #tpu.memory_space<vmem>>, vector<16x128xf32>
      %c0_12 = arith.constant 0 : index
      %c0_13 = arith.constant 0 : index
      %14 = vector.load %arg5[%c0_12, %c0_13] : memref<1x128xf32, #tpu.memory_space<vmem>>, vector<1x128xf32>
      %15 = vector.broadcast %14 : vector<1x128xf32> to vector<16x128xf32>
      %16 = arith.addf %13, %15 : vector<16x128xf32>
      %c0_14 = arith.constant 0 : index
      %c0_15 = arith.constant 0 : index
      %17 = vector.load %arg6[%c0_14, %c0_15] : memref<16x128xf32, #tpu.memory_space<vmem>>, vector<16x128xf32>
      tpu.vector_store %arg6[%c0_14, %c0_15], %16 {strides = array<i32>} : memref<16x128xf32, #tpu.memory_space<vmem>>, vector<16x128xf32>,
    } else {
    }
    return
  }
  func.func @transform_0(%arg0: i32, %arg1: i32, %arg2: i32) -> (i32, i32) {
    %c0_i32 = arith.constant 0 : i32
    return %arg0, %arg2 : i32, i32
  }
  func.func @transform_1(%arg0: i32, %arg1: i32, %arg2: i32) -> (i32, i32) {
    %c0_i32 = arith.constant 0 : i32
    return %arg2, %arg1 : i32, i32
  }
  func.func @transform_2(%arg0: i32, %arg1: i32, %arg2: i32) -> (i32, i32) {
    %c0_i32 = arith.constant 0 : i32
    %c0_i32_0 = arith.constant 0 : i32
    return %c0_i32, %arg1 : i32, i32
  }
  func.func @transform_3(%arg0: i32, %arg1: i32, %arg2: i32) -> (i32, i32) {
    %c0_i32 = arith.constant 0 : i32
    return %arg0, %arg1 : i32, i32
  }
}

module attributes {stable_mosaic.version = 11 : i64} {
  func.func @_mha_kernel(%arg0: i32, %arg1: i32, %arg2: memref<1x8x128xf32, #tpu.memory_space<vmem>>, %arg3: memref<1x8x128xf32, #tpu.memory_space<vmem>>, %arg4: memref<1x8x128xf32, #tpu.memory_space<vmem>>, %arg5: memref<1x1x8xf32, #tpu.memory_space<vmem>>, %arg6: memref<1x8x128xf32, #tpu.memory_space<vmem>>, %arg7: memref<1x8x8xf32, #tpu.memory_space<vmem>>) attributes {dimension_semantics = [#tpu.dimension_semantics<parallel>, #tpu.dimension_semantics<parallel>], iteration_bounds = array<i64: 2, 1>, scalar_prefetch = 0 : i64, scratch_operands = 0 : i64, tpu.core_type = #tpu.core_type<tc>, window_params = [{transform_indices = @transform_0, window_bounds = array<i64: 1, 8, 128>}, {transform_indices = @transform_1, window_bounds = array<i64: 1, 8, 128>}, {transform_indices = @transform_2, window_bounds = array<i64: 1, 8, 128>}, {transform_indices = @transform_3, window_bounds = array<i64: 1, 1, 8>}, {transform_indices = @transform_4, window_bounds = array<i64: 1, 8, 128>}, {transform_indices = @transform_5, window_bounds = array<i64: 1, 8, 8>}]} {
    %c0 = arith.constant 0 : index
    %c0_0 = arith.constant 0 : index
    %c0_1 = arith.constant 0 : index
    %0 = vector.load %arg2[%c0, %c0_0, %c0_1] : memref<1x8x128xf32, #tpu.memory_space<vmem>>, vector<1x8x128xf32>
    %1 = vector.shape_cast %0 : vector<1x8x128xf32> to vector<8x128xf32>
    %c0_2 = arith.constant 0 : index
    %c0_3 = arith.constant 0 : index
    %c0_4 = arith.constant 0 : index
    %2 = vector.load %arg3[%c0_2, %c0_3, %c0_4] : memref<1x8x128xf32, #tpu.memory_space<vmem>>, vector<1x8x128xf32>
    %3 = vector.shape_cast %2 : vector<1x8x128xf32> to vector<8x128xf32>
    %c0_5 = arith.constant 0 : index
    %c0_6 = arith.constant 0 : index
    %c0_7 = arith.constant 0 : index
    %4 = vector.load %arg4[%c0_5, %c0_6, %c0_7] : memref<1x8x128xf32, #tpu.memory_space<vmem>>, vector<1x8x128xf32>
    %5 = vector.shape_cast %4 : vector<1x8x128xf32> to vector<8x128xf32>
    %c0_8 = arith.constant 0 : index
    %c0_9 = arith.constant 0 : index
    %c0_10 = arith.constant 0 : index
    %6 = vector.load %arg5[%c0_8, %c0_9, %c0_10] : memref<1x1x8xf32, #tpu.memory_space<vmem>>, vector<1x1x8xf32>
    %7 = vector.shape_cast %6 : vector<1x1x8xf32> to vector<1x8xf32>
    %cst = arith.constant 0.000000e+00 : f32
    %8 = vector.broadcast %cst : f32 to vector<8x8xf32>
    %9 = vector.extract_strided_slice %1 {offsets = [0, 0], sizes = [8, 32], strides = [1, 1]} : vector<8x128xf32> to vector<8x32xf32>
    %10 = arith.truncf %9 : vector<8x32xf32> to vector<8x32xbf16>
    %11 = vector.extract_strided_slice %3 {offsets = [0, 0], sizes = [8, 32], strides = [1, 1]} : vector<8x128xf32> to vector<8x32xf32>
    %12 = arith.truncf %11 : vector<8x32xf32> to vector<8x32xbf16>
    %13 = vector.extract_strided_slice %5 {offsets = [0, 0], sizes = [8, 32], strides = [1, 1]} : vector<8x128xf32> to vector<8x32xf32>
    %14 = arith.truncf %13 : vector<8x32xf32> to vector<8x32xbf16>
    %cst_11 = arith.constant dense<0.000000e+00> : vector<8x8xf32>
    %15 = tpu.matmul %10, %12, %cst_11 {dimension_numbers = #tpu.dot_dimension_numbers<[1], [1], [0], [0], [0, 0, 1, 0], [], []>} : vector<8x32xbf16>, vector<8x32xbf16>, vector<8x8xf32> -> vector<8x8xf32>
    %16 = vector.broadcast %7 : vector<1x8xf32> to vector<8x8xf32>
    %17 = arith.addf %15, %16 : vector<8x8xf32>
    %cst_12 = arith.constant dense<0xFF800000> : vector<8xf32>
    %18 = vector.multi_reduction <maximumf>, %17, %cst_12 [1] : vector<8x8xf32> to vector<8xf32>
    %19 = vector.shape_cast %18 : vector<8xf32> to vector<8x1xf32>
    %20 = vector.broadcast %19 : vector<8x1xf32> to vector<8x8xf32>
    %21 = arith.subf %17, %20 : vector<8x8xf32>
    %22 = math.exp %21 : vector<8x8xf32>
    %cst_13 = arith.constant dense<0.000000e+00> : vector<8xf32>
    %23 = vector.multi_reduction <add>, %22, %cst_13 [1] : vector<8x8xf32> to vector<8xf32>
    %24 = vector.shape_cast %23 : vector<8xf32> to vector<8x1xf32>
    %25 = tpu.reciprocal %24 {approx = true} : vector<8x1xf32> -> vector<8x1xf32>
    %26 = vector.broadcast %25 : vector<8x1xf32> to vector<8x8xf32>
    %27 = arith.mulf %22, %26 : vector<8x8xf32>
    %28 = arith.truncf %27 : vector<8x8xf32> to vector<8x8xbf16>
    %cst_14 = arith.constant dense<0.000000e+00> : vector<8x32xf32>
    %29 = tpu.matmul %28, %14, %cst_14 {dimension_numbers = #tpu.dot_dimension_numbers<[1], [0], [0], [1], [0, 0, 1, 1], [], []>} : vector<8x8xbf16>, vector<8x32xbf16>, vector<8x32xf32> -> vector<8x32xf32>
    %30 = arith.addf %8, %27 : vector<8x8xf32>
    %31 = vector.extract_strided_slice %1 {offsets = [0, 32], sizes = [8, 32], strides = [1, 1]} : vector<8x128xf32> to vector<8x32xf32>
    %32 = arith.truncf %31 : vector<8x32xf32> to vector<8x32xbf16>
    %33 = vector.extract_strided_slice %3 {offsets = [0, 32], sizes = [8, 32], strides = [1, 1]} : vector<8x128xf32> to vector<8x32xf32>
    %34 = arith.truncf %33 : vector<8x32xf32> to vector<8x32xbf16>
    %35 = vector.extract_strided_slice %5 {offsets = [0, 32], sizes = [8, 32], strides = [1, 1]} : vector<8x128xf32> to vector<8x32xf32>
    %36 = arith.truncf %35 : vector<8x32xf32> to vector<8x32xbf16>
    %cst_15 = arith.constant dense<0.000000e+00> : vector<8x8xf32>
    %37 = tpu.matmul %32, %34, %cst_15 {dimension_numbers = #tpu.dot_dimension_numbers<[1], [1], [0], [0], [0, 0, 1, 0], [], []>} : vector<8x32xbf16>, vector<8x32xbf16>, vector<8x8xf32> -> vector<8x8xf32>
    %38 = vector.broadcast %7 : vector<1x8xf32> to vector<8x8xf32>
    %39 = arith.addf %37, %38 : vector<8x8xf32>
    %cst_16 = arith.constant dense<0xFF800000> : vector<8xf32>
    %40 = vector.multi_reduction <maximumf>, %39, %cst_16 [1] : vector<8x8xf32> to vector<8xf32>
    %41 = vector.shape_cast %40 : vector<8xf32> to vector<8x1xf32>
    %42 = vector.broadcast %41 : vector<8x1xf32> to vector<8x8xf32>
    %43 = arith.subf %39, %42 : vector<8x8xf32>
    %44 = math.exp %43 : vector<8x8xf32>
    %cst_17 = arith.constant dense<0.000000e+00> : vector<8xf32>
    %45 = vector.multi_reduction <add>, %44, %cst_17 [1] : vector<8x8xf32> to vector<8xf32>
    %46 = vector.shape_cast %45 : vector<8xf32> to vector<8x1xf32>
    %47 = tpu.reciprocal %46 {approx = true} : vector<8x1xf32> -> vector<8x1xf32>
    %48 = vector.broadcast %47 : vector<8x1xf32> to vector<8x8xf32>
    %49 = arith.mulf %44, %48 : vector<8x8xf32>
    %50 = arith.truncf %49 : vector<8x8xf32> to vector<8x8xbf16>
    %cst_18 = arith.constant dense<0.000000e+00> : vector<8x32xf32>
    %51 = tpu.matmul %50, %36, %cst_18 {dimension_numbers = #tpu.dot_dimension_numbers<[1], [0], [0], [1], [0, 0, 1, 1], [], []>} : vector<8x8xbf16>, vector<8x32xbf16>, vector<8x32xf32> -> vector<8x32xf32>
    %52 = arith.addf %30, %49 : vector<8x8xf32>
    %53 = vector.extract_strided_slice %1 {offsets = [0, 64], sizes = [8, 32], strides = [1, 1]} : vector<8x128xf32> to vector<8x32xf32>
    %54 = arith.truncf %53 : vector<8x32xf32> to vector<8x32xbf16>
    %55 = vector.extract_strided_slice %3 {offsets = [0, 64], sizes = [8, 32], strides = [1, 1]} : vector<8x128xf32> to vector<8x32xf32>
    %56 = arith.truncf %55 : vector<8x32xf32> to vector<8x32xbf16>
    %57 = vector.extract_strided_slice %5 {offsets = [0, 64], sizes = [8, 32], strides = [1, 1]} : vector<8x128xf32> to vector<8x32xf32>
    %58 = arith.truncf %57 : vector<8x32xf32> to vector<8x32xbf16>
    %cst_19 = arith.constant dense<0.000000e+00> : vector<8x8xf32>
    %59 = tpu.matmul %54, %56, %cst_19 {dimension_numbers = #tpu.dot_dimension_numbers<[1], [1], [0], [0], [0, 0, 1, 0], [], []>} : vector<8x32xbf16>, vector<8x32xbf16>, vector<8x8xf32> -> vector<8x8xf32>
    %60 = vector.broadcast %7 : vector<1x8xf32> to vector<8x8xf32>
    %61 = arith.addf %59, %60 : vector<8x8xf32>
    %cst_20 = arith.constant dense<0xFF800000> : vector<8xf32>
    %62 = vector.multi_reduction <maximumf>, %61, %cst_20 [1] : vector<8x8xf32> to vector<8xf32>
    %63 = vector.shape_cast %62 : vector<8xf32> to vector<8x1xf32>
    %64 = vector.broadcast %63 : vector<8x1xf32> to vector<8x8xf32>
    %65 = arith.subf %61, %64 : vector<8x8xf32>
    %66 = math.exp %65 : vector<8x8xf32>
    %cst_21 = arith.constant dense<0.000000e+00> : vector<8xf32>
    %67 = vector.multi_reduction <add>, %66, %cst_21 [1] : vector<8x8xf32> to vector<8xf32>
    %68 = vector.shape_cast %67 : vector<8xf32> to vector<8x1xf32>
    %69 = tpu.reciprocal %68 {approx = true} : vector<8x1xf32> -> vector<8x1xf32>
    %70 = vector.broadcast %69 : vector<8x1xf32> to vector<8x8xf32>
    %71 = arith.mulf %66, %70 : vector<8x8xf32>
    %72 = arith.truncf %71 : vector<8x8xf32> to vector<8x8xbf16>
    %cst_22 = arith.constant dense<0.000000e+00> : vector<8x32xf32>
    %73 = tpu.matmul %72, %58, %cst_22 {dimension_numbers = #tpu.dot_dimension_numbers<[1], [0], [0], [1], [0, 0, 1, 1], [], []>} : vector<8x8xbf16>, vector<8x32xbf16>, vector<8x32xf32> -> vector<8x32xf32>
    %74 = arith.addf %52, %71 : vector<8x8xf32>
    %75 = vector.extract_strided_slice %1 {offsets = [0, 96], sizes = [8, 32], strides = [1, 1]} : vector<8x128xf32> to vector<8x32xf32>
    %76 = arith.truncf %75 : vector<8x32xf32> to vector<8x32xbf16>
    %77 = vector.extract_strided_slice %3 {offsets = [0, 96], sizes = [8, 32], strides = [1, 1]} : vector<8x128xf32> to vector<8x32xf32>
    %78 = arith.truncf %77 : vector<8x32xf32> to vector<8x32xbf16>
    %79 = vector.extract_strided_slice %5 {offsets = [0, 96], sizes = [8, 32], strides = [1, 1]} : vector<8x128xf32> to vector<8x32xf32>
    %80 = arith.truncf %79 : vector<8x32xf32> to vector<8x32xbf16>
    %cst_23 = arith.constant dense<0.000000e+00> : vector<8x8xf32>
    %81 = tpu.matmul %76, %78, %cst_23 {dimension_numbers = #tpu.dot_dimension_numbers<[1], [1], [0], [0], [0, 0, 1, 0], [], []>} : vector<8x32xbf16>, vector<8x32xbf16>, vector<8x8xf32> -> vector<8x8xf32>
    %82 = vector.broadcast %7 : vector<1x8xf32> to vector<8x8xf32>
    %83 = arith.addf %81, %82 : vector<8x8xf32>
    %cst_24 = arith.constant dense<0xFF800000> : vector<8xf32>
    %84 = vector.multi_reduction <maximumf>, %83, %cst_24 [1] : vector<8x8xf32> to vector<8xf32>
    %85 = vector.shape_cast %84 : vector<8xf32> to vector<8x1xf32>
    %86 = vector.broadcast %85 : vector<8x1xf32> to vector<8x8xf32>
    %87 = arith.subf %83, %86 : vector<8x8xf32>
    %88 = math.exp %87 : vector<8x8xf32>
    %cst_25 = arith.constant dense<0.000000e+00> : vector<8xf32>
    %89 = vector.multi_reduction <add>, %88, %cst_25 [1] : vector<8x8xf32> to vector<8xf32>
    %90 = vector.shape_cast %89 : vector<8xf32> to vector<8x1xf32>
    %91 = tpu.reciprocal %90 {approx = true} : vector<8x1xf32> -> vector<8x1xf32>
    %92 = vector.broadcast %91 : vector<8x1xf32> to vector<8x8xf32>
    %93 = arith.mulf %88, %92 : vector<8x8xf32>
    %94 = arith.truncf %93 : vector<8x8xf32> to vector<8x8xbf16>
    %cst_26 = arith.constant dense<0.000000e+00> : vector<8x32xf32>
    %95 = tpu.matmul %94, %80, %cst_26 {dimension_numbers = #tpu.dot_dimension_numbers<[1], [0], [0], [1], [0, 0, 1, 1], [], []>} : vector<8x8xbf16>, vector<8x32xbf16>, vector<8x32xf32> -> vector<8x32xf32>
    %96 = arith.addf %74, %93 : vector<8x8xf32>
    %97 = tpu.concatenate %29, %51, %73, %95 in 1 : vector<8x32xf32>, vector<8x32xf32>, vector<8x32xf32>, vector<8x32xf32> -> vector<8x128xf32>
    %c0_27 = arith.constant 0 : index
    %c0_28 = arith.constant 0 : index
    %c0_29 = arith.constant 0 : index
    %98 = vector.load %arg6[%c0_27, %c0_28, %c0_29] : memref<1x8x128xf32, #tpu.memory_space<vmem>>, vector<1x8x128xf32>
    %99 = vector.shape_cast %98 : vector<1x8x128xf32> to vector<8x128xf32>
    %100 = vector.shape_cast %97 : vector<8x128xf32> to vector<1x8x128xf32>
    tpu.vector_store %arg6[%c0_27, %c0_28, %c0_29], %100 {strides = array<i32>} : memref<1x8x128xf32, #tpu.memory_space<vmem>>, vector<1x8x128xf32>,
    %cst_30 = arith.constant 2.500000e-01 : f32
    %101 = vector.broadcast %cst_30 : f32 to vector<8x8xf32>
    %102 = arith.mulf %96, %101 : vector<8x8xf32>
    %c0_31 = arith.constant 0 : index
    %c0_32 = arith.constant 0 : index
    %c0_33 = arith.constant 0 : index
    %103 = vector.load %arg7[%c0_31, %c0_32, %c0_33] : memref<1x8x8xf32, #tpu.memory_space<vmem>>, vector<1x8x8xf32>
    %104 = vector.shape_cast %103 : vector<1x8x8xf32> to vector<8x8xf32>
    %105 = vector.shape_cast %102 : vector<8x8xf32> to vector<1x8x8xf32>
    tpu.vector_store %arg7[%c0_31, %c0_32, %c0_33], %105 {strides = array<i32>} : memref<1x8x8xf32, #tpu.memory_space<vmem>>, vector<1x8x8xf32>,
    return
  }
  func.func @transform_0(%arg0: i32, %arg1: i32) -> (i32, i32, i32) {
    %c0_i32 = arith.constant 0 : i32
    %c0_i32_0 = arith.constant 0 : i32
    return %arg0, %arg1, %c0_i32 : i32, i32, i32
  }
  func.func @transform_1(%arg0: i32, %arg1: i32) -> (i32, i32, i32) {
    %c0_i32 = arith.constant 0 : i32
    %c0_i32_0 = arith.constant 0 : i32
    %c0_i32_1 = arith.constant 0 : i32
    return %arg0, %c0_i32, %c0_i32_0 : i32, i32, i32
  }
  func.func @transform_2(%arg0: i32, %arg1: i32) -> (i32, i32, i32) {
    %c0_i32 = arith.constant 0 : i32
    %c0_i32_0 = arith.constant 0 : i32
    %c0_i32_1 = arith.constant 0 : i32
    return %arg0, %c0_i32, %c0_i32_0 : i32, i32, i32
  }
  func.func @transform_3(%arg0: i32, %arg1: i32) -> (i32, i32, i32) {
    %c0_i32 = arith.constant 0 : i32
    %c0_i32_0 = arith.constant 0 : i32
    %c0_i32_1 = arith.constant 0 : i32
    return %arg0, %c0_i32, %c0_i32_0 : i32, i32, i32
  }
  func.func @transform_4(%arg0: i32, %arg1: i32) -> (i32, i32, i32) {
    %c0_i32 = arith.constant 0 : i32
    %c0_i32_0 = arith.constant 0 : i32
    return %arg0, %arg1, %c0_i32 : i32, i32, i32
  }
  func.func @transform_5(%arg0: i32, %arg1: i32) -> (i32, i32, i32) {
    %c0_i32 = arith.constant 0 : i32
    %c0_i32_0 = arith.constant 0 : i32
    return %arg0, %arg1, %c0_i32 : i32, i32, i32
  }
}

module attributes {stable_mosaic.version = 11 : i64} {
  func.func @_linear_kernel(%arg0: i32, %arg1: i32, %arg2: i32, %arg3: memref<16x128xf32, #tpu.memory_space<vmem>>, %arg4: memref<128x256xbf16, #tpu.memory_space<vmem>>, %arg5: memref<1x256xf32, #tpu.memory_space<vmem>>, %arg6: memref<16x256xf32, #tpu.memory_space<vmem>>, %arg7: memref<16x256xf32, #tpu.memory_space<vmem>>) attributes {dimension_semantics = [#tpu.dimension_semantics<parallel>, #tpu.dimension_semantics<parallel>, #tpu.dimension_semantics<arbitrary>], iteration_bounds = array<i64: 1, 1, 1>, scalar_prefetch = 0 : i64, scratch_operands = 1 : i64, tpu.core_type = #tpu.core_type<tc>, window_params = [{transform_indices = @transform_0, window_bounds = array<i64: 16, 128>}, {transform_indices = @transform_1, window_bounds = array<i64: 128, 256>}, {transform_indices = @transform_2, window_bounds = array<i64: 1, 256>}, {transform_indices = @transform_3, window_bounds = array<i64: 16, 256>}]} {
    %c0_i32 = arith.constant 0 : i32
    %0 = arith.cmpi eq, %arg2, %c0_i32 : i32
    %1 = arith.extui %0 : i1 to i32
    %c0_i32_0 = arith.constant 0 : i32
    %2 = arith.cmpi ne, %1, %c0_i32_0 : i32
    scf.if %2 {
      %cst_10 = arith.constant 0.000000e+00 : f32
      %13 = vector.broadcast %cst_10 : f32 to vector<16x256xf32>
      %c0_11 = arith.constant 0 : index
      %c0_12 = arith.constant 0 : index
      %14 = vector.load %arg7[%c0_11, %c0_12] : memref<16x256xf32, #tpu.memory_space<vmem>>, vector<16x256xf32>
      tpu.vector_store %arg7[%c0_11, %c0_12], %13 {strides = array<i32>} : memref<16x256xf32, #tpu.memory_space<vmem>>, vector<16x256xf32>,
    } else {
    }
    %c0 = arith.constant 0 : index
    %c0_1 = arith.constant 0 : index
    %3 = vector.load %arg7[%c0, %c0_1] : memref<16x256xf32, #tpu.memory_space<vmem>>, vector<16x256xf32>
    %c0_2 = arith.constant 0 : index
    %c0_3 = arith.constant 0 : index
    %4 = vector.load %arg3[%c0_2, %c0_3] : memref<16x128xf32, #tpu.memory_space<vmem>>, vector<16x128xf32>
    %5 = arith.truncf %4 : vector<16x128xf32> to vector<16x128xbf16>
    %c0_4 = arith.constant 0 : index
    %c0_5 = arith.constant 0 : index
    %6 = vector.load %arg4[%c0_4, %c0_5] : memref<128x256xbf16, #tpu.memory_space<vmem>>, vector<128x256xbf16>
    %cst = arith.constant dense<0.000000e+00> : vector<16x256xf32>
    %7 = tpu.matmul %5, %6, %cst {dimension_numbers = #tpu.dot_dimension_numbers<[1], [0], [0], [1], [0, 0, 1, 1], [], []>} : vector<16x128xbf16>, vector<128x256xbf16>, vector<16x256xf32> -> vector<16x256xf32>
    %8 = arith.addf %3, %7 : vector<16x256xf32>
    %c0_6 = arith.constant 0 : index
    %c0_7 = arith.constant 0 : index
    %9 = vector.load %arg7[%c0_6, %c0_7] : memref<16x256xf32, #tpu.memory_space<vmem>>, vector<16x256xf32>
    tpu.vector_store %arg7[%c0_6, %c0_7], %8 {strides = array<i32>} : memref<16x256xf32, #tpu.memory_space<vmem>>, vector<16x256xf32>,
    %c0_i32_8 = arith.constant 0 : i32
    %10 = arith.cmpi eq, %arg2, %c0_i32_8 : i32
    %11 = arith.extui %10 : i1 to i32
    %c0_i32_9 = arith.constant 0 : i32
    %12 = arith.cmpi ne, %11, %c0_i32_9 : i32
    scf.if %12 {
      %c0_10 = arith.constant 0 : index
      %c0_11 = arith.constant 0 : index
      %13 = vector.load %arg7[%c0_10, %c0_11] : memref<16x256xf32, #tpu.memory_space<vmem>>, vector<16x256xf32>
      %c0_12 = arith.constant 0 : index
      %c0_13 = arith.constant 0 : index
      %14 = vector.load %arg5[%c0_12, %c0_13] : memref<1x256xf32, #tpu.memory_space<vmem>>, vector<1x256xf32>
      %15 = vector.broadcast %14 : vector<1x256xf32> to vector<16x256xf32>
      %16 = arith.addf %13, %15 : vector<16x256xf32>
      %cst_14 = arith.constant 0.000000e+00 : f32
      %17 = vector.broadcast %cst_14 : f32 to vector<16x256xf32>
      %18 = arith.maximumf %16, %17 : vector<16x256xf32>
      %c0_15 = arith.constant 0 : index
      %c0_16 = arith.constant 0 : index
      %19 = vector.load %arg6[%c0_15, %c0_16] : memref<16x256xf32, #tpu.memory_space<vmem>>, vector<16x256xf32>
      tpu.vector_store %arg6[%c0_15, %c0_16], %18 {strides = array<i32>} : memref<16x256xf32, #tpu.memory_space<vmem>>, vector<16x256xf32>,
    } else {
    }
    return
  }
  func.func @transform_0(%arg0: i32, %arg1: i32, %arg2: i32) -> (i32, i32) {
    %c0_i32 = arith.constant 0 : i32
    return %arg0, %arg2 : i32, i32
  }
  func.func @transform_1(%arg0: i32, %arg1: i32, %arg2: i32) -> (i32, i32) {
    %c0_i32 = arith.constant 0 : i32
    return %arg2, %arg1 : i32, i32
  }
  func.func @transform_2(%arg0: i32, %arg1: i32, %arg2: i32) -> (i32, i32) {
    %c0_i32 = arith.constant 0 : i32
    %c0_i32_0 = arith.constant 0 : i32
    return %c0_i32, %arg1 : i32, i32
  }
  func.func @transform_3(%arg0: i32, %arg1: i32, %arg2: i32) -> (i32, i32) {
    %c0_i32 = arith.constant 0 : i32
    return %arg0, %arg1 : i32, i32
  }
}

module attributes {stable_mosaic.version = 11 : i64} {
  func.func @_linear_res_ln_kernel(%arg0: i32, %arg1: i32, %arg2: memref<16x128xf32, #tpu.memory_space<vmem>>, %arg3: memref<128x128xbf16, #tpu.memory_space<vmem>>, %arg4: memref<1x128xf32, #tpu.memory_space<vmem>>, %arg5: memref<16x128xf32, #tpu.memory_space<vmem>>, %arg6: memref<1x128xf32, #tpu.memory_space<vmem>>, %arg7: memref<1x128xf32, #tpu.memory_space<vmem>>, %arg8: memref<16x128xf32, #tpu.memory_space<vmem>>, %arg9: memref<16x128xf32, #tpu.memory_space<vmem>>) attributes {dimension_semantics = [#tpu.dimension_semantics<parallel>, #tpu.dimension_semantics<arbitrary>], iteration_bounds = array<i64: 1, 1>, scalar_prefetch = 0 : i64, scratch_operands = 1 : i64, tpu.core_type = #tpu.core_type<tc>, window_params = [{transform_indices = @transform_0, window_bounds = array<i64: 16, 128>}, {transform_indices = @transform_1, window_bounds = array<i64: 128, 128>}, {pipeline_mode = #tpu.pipeline_mode<synchronous>, transform_indices = @transform_2, window_bounds = array<i64: 1, 128>}, {transform_indices = @transform_3, window_bounds = array<i64: 16, 128>}, {pipeline_mode = #tpu.pipeline_mode<synchronous>, transform_indices = @transform_4, window_bounds = array<i64: 1, 128>}, {pipeline_mode = #tpu.pipeline_mode<synchronous>, transform_indices = @transform_5, window_bounds = array<i64: 1, 128>}, {transform_indices = @transform_6, window_bounds = array<i64: 16, 128>}]} {
    %c0_i32 = arith.constant 0 : i32
    %0 = arith.cmpi eq, %arg1, %c0_i32 : i32
    %1 = arith.extui %0 : i1 to i32
    %c0_i32_0 = arith.constant 0 : i32
    %2 = arith.cmpi ne, %1, %c0_i32_0 : i32
    scf.if %2 {
      %cst_10 = arith.constant 0.000000e+00 : f32
      %13 = vector.broadcast %cst_10 : f32 to vector<16x128xf32>
      %c0_11 = arith.constant 0 : index
      %c0_12 = arith.constant 0 : index
      %14 = vector.load %arg9[%c0_11, %c0_12] : memref<16x128xf32, #tpu.memory_space<vmem>>, vector<16x128xf32>
      tpu.vector_store %arg9[%c0_11, %c0_12], %13 {strides = array<i32>} : memref<16x128xf32, #tpu.memory_space<vmem>>, vector<16x128xf32>,
    } else {
    }
    %c0 = arith.constant 0 : index
    %c0_1 = arith.constant 0 : index
    %3 = vector.load %arg9[%c0, %c0_1] : memref<16x128xf32, #tpu.memory_space<vmem>>, vector<16x128xf32>
    %c0_2 = arith.constant 0 : index
    %c0_3 = arith.constant 0 : index
    %4 = vector.load %arg2[%c0_2, %c0_3] : memref<16x128xf32, #tpu.memory_space<vmem>>, vector<16x128xf32>
    %5 = arith.truncf %4 : vector<16x128xf32> to vector<16x128xbf16>
    %c0_4 = arith.constant 0 : index
    %c0_5 = arith.constant 0 : index
    %6 = vector.load %arg3[%c0_4, %c0_5] : memref<128x128xbf16, #tpu.memory_space<vmem>>, vector<128x128xbf16>
    %cst = arith.constant dense<0.000000e+00> : vector<16x128xf32>
    %7 = tpu.matmul %5, %6, %cst {dimension_numbers = #tpu.dot_dimension_numbers<[1], [0], [0], [1], [0, 0, 1, 1], [], []>} : vector<16x128xbf16>, vector<128x128xbf16>, vector<16x128xf32> -> vector<16x128xf32>
    %8 = arith.addf %3, %7 : vector<16x128xf32>
    %c0_6 = arith.constant 0 : index
    %c0_7 = arith.constant 0 : index
    %9 = vector.load %arg9[%c0_6, %c0_7] : memref<16x128xf32, #tpu.memory_space<vmem>>, vector<16x128xf32>
    tpu.vector_store %arg9[%c0_6, %c0_7], %8 {strides = array<i32>} : memref<16x128xf32, #tpu.memory_space<vmem>>, vector<16x128xf32>,
    %c0_i32_8 = arith.constant 0 : i32
    %10 = arith.cmpi eq, %arg1, %c0_i32_8 : i32
    %11 = arith.extui %10 : i1 to i32
    %c0_i32_9 = arith.constant 0 : i32
    %12 = arith.cmpi ne, %11, %c0_i32_9 : i32
    scf.if %12 {
      %c0_10 = arith.constant 0 : index
      %c0_11 = arith.constant 0 : index
      %13 = vector.load %arg9[%c0_10, %c0_11] : memref<16x128xf32, #tpu.memory_space<vmem>>, vector<16x128xf32>
      %c0_12 = arith.constant 0 : index
      %c0_13 = arith.constant 0 : index
      %14 = vector.load %arg4[%c0_12, %c0_13] : memref<1x128xf32, #tpu.memory_space<vmem>>, vector<1x128xf32>
      %15 = vector.broadcast %14 : vector<1x128xf32> to vector<16x128xf32>
      %16 = arith.addf %13, %15 : vector<16x128xf32>
      %c0_14 = arith.constant 0 : index
      %c0_15 = arith.constant 0 : index
      %17 = vector.load %arg5[%c0_14, %c0_15] : memref<16x128xf32, #tpu.memory_space<vmem>>, vector<16x128xf32>
      %18 = arith.addf %16, %17 : vector<16x128xf32>
      %cst_16 = arith.constant dense<0.000000e+00> : vector<16xf32>
      %19 = vector.multi_reduction <add>, %18, %cst_16 [1] : vector<16x128xf32> to vector<16xf32>
      %20 = vector.shape_cast %19 : vector<16xf32> to vector<16x1xf32>
      %cst_17 = arith.constant 1.280000e+02 : f32
      %21 = vector.broadcast %cst_17 : f32 to vector<16x1xf32>
      %22 = arith.divf %20, %21 : vector<16x1xf32>
      %23 = vector.broadcast %22 : vector<16x1xf32> to vector<16x128xf32>
      %24 = arith.subf %18, %23 : vector<16x128xf32>
      %25 = arith.mulf %24, %24 : vector<16x128xf32>
      %cst_18 = arith.constant dense<0.000000e+00> : vector<16xf32>
      %26 = vector.multi_reduction <add>, %25, %cst_18 [1] : vector<16x128xf32> to vector<16xf32>
      %27 = vector.shape_cast %26 : vector<16xf32> to vector<16x1xf32>
      %cst_19 = arith.constant 1.280000e+02 : f32
      %28 = vector.broadcast %cst_19 : f32 to vector<16x1xf32>
      %29 = arith.divf %27, %28 : vector<16x1xf32>
      %30 = vector.broadcast %22 : vector<16x1xf32> to vector<16x128xf32>
      %31 = arith.subf %18, %30 : vector<16x128xf32>
      %cst_20 = arith.constant 9.99999974E-6 : f32
      %32 = vector.broadcast %cst_20 : f32 to vector<16x1xf32>
      %33 = arith.addf %29, %32 : vector<16x1xf32>
      %34 = math.rsqrt %33 : vector<16x1xf32>
      %35 = vector.broadcast %34 : vector<16x1xf32> to vector<16x128xf32>
      %36 = arith.mulf %31, %35 : vector<16x128xf32>
      %c0_21 = arith.constant 0 : index
      %c0_22 = arith.constant 0 : index
      %37 = vector.load %arg6[%c0_21, %c0_22] : memref<1x128xf32, #tpu.memory_space<vmem>>, vector<1x128xf32>
      %38 = vector.broadcast %37 : vector<1x128xf32> to vector<16x128xf32>
      %39 = arith.mulf %36, %38 : vector<16x128xf32>
      %c0_23 = arith.constant 0 : index
      %c0_24 = arith.constant 0 : index
      %40 = vector.load %arg7[%c0_23, %c0_24] : memref<1x128xf32, #tpu.memory_space<vmem>>, vector<1x128xf32>
      %41 = vector.broadcast %40 : vector<1x128xf32> to vector<16x128xf32>
      %42 = arith.addf %39, %41 : vector<16x128xf32>
      %c0_25 = arith.constant 0 : index
      %c0_26 = arith.constant 0 : index
      %43 = vector.load %arg8[%c0_25, %c0_26] : memref<16x128xf32, #tpu.memory_space<vmem>>, vector<16x128xf32>
      tpu.vector_store %arg8[%c0_25, %c0_26], %42 {strides = array<i32>} : memref<16x128xf32, #tpu.memory_space<vmem>>, vector<16x128xf32>,
    } else {
    }
    return
  }
  func.func @transform_0(%arg0: i32, %arg1: i32) -> (i32, i32) {
    %c0_i32 = arith.constant 0 : i32
    return %arg0, %arg1 : i32, i32
  }
  func.func @transform_1(%arg0: i32, %arg1: i32) -> (i32, i32) {
    %c0_i32 = arith.constant 0 : i32
    %c0_i32_0 = arith.constant 0 : i32
    return %arg1, %c0_i32 : i32, i32
  }
  func.func @transform_2(%arg0: i32, %arg1: i32) -> (i32, i32) {
    %c0_i32 = arith.constant 0 : i32
    %c0_i32_0 = arith.constant 0 : i32
    %c0_i32_1 = arith.constant 0 : i32
    return %c0_i32, %c0_i32_0 : i32, i32
  }
  func.func @transform_3(%arg0: i32, %arg1: i32) -> (i32, i32) {
    %c0_i32 = arith.constant 0 : i32
    %c0_i32_0 = arith.constant 0 : i32
    return %arg0, %c0_i32 : i32, i32
  }
  func.func @transform_4(%arg0: i32, %arg1: i32) -> (i32, i32) {
    %c0_i32 = arith.constant 0 : i32
    %c0_i32_0 = arith.constant 0 : i32
    %c0_i32_1 = arith.constant 0 : i32
    return %c0_i32, %c0_i32_0 : i32, i32
  }
  func.func @transform_5(%arg0: i32, %arg1: i32) -> (i32, i32) {
    %c0_i32 = arith.constant 0 : i32
    %c0_i32_0 = arith.constant 0 : i32
    %c0_i32_1 = arith.constant 0 : i32
    return %c0_i32, %c0_i32_0 : i32, i32
  }
  func.func @transform_6(%arg0: i32, %arg1: i32) -> (i32, i32) {
    %c0_i32 = arith.constant 0 : i32
    %c0_i32_0 = arith.constant 0 : i32
    return %arg0, %c0_i32 : i32, i32
  }
}

module attributes {stable_mosaic.version = 11 : i64} {
  func.func @_linear_res_ln_kernel(%arg0: i32, %arg1: i32, %arg2: memref<16x256xf32, #tpu.memory_space<vmem>>, %arg3: memref<256x128xbf16, #tpu.memory_space<vmem>>, %arg4: memref<1x128xf32, #tpu.memory_space<vmem>>, %arg5: memref<16x128xf32, #tpu.memory_space<vmem>>, %arg6: memref<1x128xf32, #tpu.memory_space<vmem>>, %arg7: memref<1x128xf32, #tpu.memory_space<vmem>>, %arg8: memref<16x128xf32, #tpu.memory_space<vmem>>, %arg9: memref<16x128xf32, #tpu.memory_space<vmem>>) attributes {dimension_semantics = [#tpu.dimension_semantics<parallel>, #tpu.dimension_semantics<arbitrary>], iteration_bounds = array<i64: 1, 1>, scalar_prefetch = 0 : i64, scratch_operands = 1 : i64, tpu.core_type = #tpu.core_type<tc>, window_params = [{transform_indices = @transform_0, window_bounds = array<i64: 16, 256>}, {transform_indices = @transform_1, window_bounds = array<i64: 256, 128>}, {pipeline_mode = #tpu.pipeline_mode<synchronous>, transform_indices = @transform_2, window_bounds = array<i64: 1, 128>}, {transform_indices = @transform_3, window_bounds = array<i64: 16, 128>}, {pipeline_mode = #tpu.pipeline_mode<synchronous>, transform_indices = @transform_4, window_bounds = array<i64: 1, 128>}, {pipeline_mode = #tpu.pipeline_mode<synchronous>, transform_indices = @transform_5, window_bounds = array<i64: 1, 128>}, {transform_indices = @transform_6, window_bounds = array<i64: 16, 128>}]} {
    %c0_i32 = arith.constant 0 : i32
    %0 = arith.cmpi eq, %arg1, %c0_i32 : i32
    %1 = arith.extui %0 : i1 to i32
    %c0_i32_0 = arith.constant 0 : i32
    %2 = arith.cmpi ne, %1, %c0_i32_0 : i32
    scf.if %2 {
      %cst_10 = arith.constant 0.000000e+00 : f32
      %13 = vector.broadcast %cst_10 : f32 to vector<16x128xf32>
      %c0_11 = arith.constant 0 : index
      %c0_12 = arith.constant 0 : index
      %14 = vector.load %arg9[%c0_11, %c0_12] : memref<16x128xf32, #tpu.memory_space<vmem>>, vector<16x128xf32>
      tpu.vector_store %arg9[%c0_11, %c0_12], %13 {strides = array<i32>} : memref<16x128xf32, #tpu.memory_space<vmem>>, vector<16x128xf32>,
    } else {
    }
    %c0 = arith.constant 0 : index
    %c0_1 = arith.constant 0 : index
    %3 = vector.load %arg9[%c0, %c0_1] : memref<16x128xf32, #tpu.memory_space<vmem>>, vector<16x128xf32>
    %c0_2 = arith.constant 0 : index
    %c0_3 = arith.constant 0 : index
    %4 = vector.load %arg2[%c0_2, %c0_3] : memref<16x256xf32, #tpu.memory_space<vmem>>, vector<16x256xf32>
    %5 = arith.truncf %4 : vector<16x256xf32> to vector<16x256xbf16>
    %c0_4 = arith.constant 0 : index
    %c0_5 = arith.constant 0 : index
    %6 = vector.load %arg3[%c0_4, %c0_5] : memref<256x128xbf16, #tpu.memory_space<vmem>>, vector<256x128xbf16>
    %cst = arith.constant dense<0.000000e+00> : vector<16x128xf32>
    %7 = tpu.matmul %5, %6, %cst {dimension_numbers = #tpu.dot_dimension_numbers<[1], [0], [0], [1], [0, 0, 1, 1], [], []>} : vector<16x256xbf16>, vector<256x128xbf16>, vector<16x128xf32> -> vector<16x128xf32>
    %8 = arith.addf %3, %7 : vector<16x128xf32>
    %c0_6 = arith.constant 0 : index
    %c0_7 = arith.constant 0 : index
    %9 = vector.load %arg9[%c0_6, %c0_7] : memref<16x128xf32, #tpu.memory_space<vmem>>, vector<16x128xf32>
    tpu.vector_store %arg9[%c0_6, %c0_7], %8 {strides = array<i32>} : memref<16x128xf32, #tpu.memory_space<vmem>>, vector<16x128xf32>,
    %c0_i32_8 = arith.constant 0 : i32
    %10 = arith.cmpi eq, %arg1, %c0_i32_8 : i32
    %11 = arith.extui %10 : i1 to i32
    %c0_i32_9 = arith.constant 0 : i32
    %12 = arith.cmpi ne, %11, %c0_i32_9 : i32
    scf.if %12 {
      %c0_10 = arith.constant 0 : index
      %c0_11 = arith.constant 0 : index
      %13 = vector.load %arg9[%c0_10, %c0_11] : memref<16x128xf32, #tpu.memory_space<vmem>>, vector<16x128xf32>
      %c0_12 = arith.constant 0 : index
      %c0_13 = arith.constant 0 : index
      %14 = vector.load %arg4[%c0_12, %c0_13] : memref<1x128xf32, #tpu.memory_space<vmem>>, vector<1x128xf32>
      %15 = vector.broadcast %14 : vector<1x128xf32> to vector<16x128xf32>
      %16 = arith.addf %13, %15 : vector<16x128xf32>
      %c0_14 = arith.constant 0 : index
      %c0_15 = arith.constant 0 : index
      %17 = vector.load %arg5[%c0_14, %c0_15] : memref<16x128xf32, #tpu.memory_space<vmem>>, vector<16x128xf32>
      %18 = arith.addf %16, %17 : vector<16x128xf32>
      %cst_16 = arith.constant dense<0.000000e+00> : vector<16xf32>
      %19 = vector.multi_reduction <add>, %18, %cst_16 [1] : vector<16x128xf32> to vector<16xf32>
      %20 = vector.shape_cast %19 : vector<16xf32> to vector<16x1xf32>
      %cst_17 = arith.constant 1.280000e+02 : f32
      %21 = vector.broadcast %cst_17 : f32 to vector<16x1xf32>
      %22 = arith.divf %20, %21 : vector<16x1xf32>
      %23 = vector.broadcast %22 : vector<16x1xf32> to vector<16x128xf32>
      %24 = arith.subf %18, %23 : vector<16x128xf32>
      %25 = arith.mulf %24, %24 : vector<16x128xf32>
      %cst_18 = arith.constant dense<0.000000e+00> : vector<16xf32>
      %26 = vector.multi_reduction <add>, %25, %cst_18 [1] : vector<16x128xf32> to vector<16xf32>
      %27 = vector.shape_cast %26 : vector<16xf32> to vector<16x1xf32>
      %cst_19 = arith.constant 1.280000e+02 : f32
      %28 = vector.broadcast %cst_19 : f32 to vector<16x1xf32>
      %29 = arith.divf %27, %28 : vector<16x1xf32>
      %30 = vector.broadcast %22 : vector<16x1xf32> to vector<16x128xf32>
      %31 = arith.subf %18, %30 : vector<16x128xf32>
      %cst_20 = arith.constant 9.99999974E-6 : f32
      %32 = vector.broadcast %cst_20 : f32 to vector<16x1xf32>
      %33 = arith.addf %29, %32 : vector<16x1xf32>
      %34 = math.rsqrt %33 : vector<16x1xf32>
      %35 = vector.broadcast %34 : vector<16x1xf32> to vector<16x128xf32>
      %36 = arith.mulf %31, %35 : vector<16x128xf32>
      %c0_21 = arith.constant 0 : index
      %c0_22 = arith.constant 0 : index
      %37 = vector.load %arg6[%c0_21, %c0_22] : memref<1x128xf32, #tpu.memory_space<vmem>>, vector<1x128xf32>
      %38 = vector.broadcast %37 : vector<1x128xf32> to vector<16x128xf32>
      %39 = arith.mulf %36, %38 : vector<16x128xf32>
      %c0_23 = arith.constant 0 : index
      %c0_24 = arith.constant 0 : index
      %40 = vector.load %arg7[%c0_23, %c0_24] : memref<1x128xf32, #tpu.memory_space<vmem>>, vector<1x128xf32>
      %41 = vector.broadcast %40 : vector<1x128xf32> to vector<16x128xf32>
      %42 = arith.addf %39, %41 : vector<16x128xf32>
      %c0_25 = arith.constant 0 : index
      %c0_26 = arith.constant 0 : index
      %43 = vector.load %arg8[%c0_25, %c0_26] : memref<16x128xf32, #tpu.memory_space<vmem>>, vector<16x128xf32>
      tpu.vector_store %arg8[%c0_25, %c0_26], %42 {strides = array<i32>} : memref<16x128xf32, #tpu.memory_space<vmem>>, vector<16x128xf32>,
    } else {
    }
    return
  }
  func.func @transform_0(%arg0: i32, %arg1: i32) -> (i32, i32) {
    %c0_i32 = arith.constant 0 : i32
    return %arg0, %arg1 : i32, i32
  }
  func.func @transform_1(%arg0: i32, %arg1: i32) -> (i32, i32) {
    %c0_i32 = arith.constant 0 : i32
    %c0_i32_0 = arith.constant 0 : i32
    return %arg1, %c0_i32 : i32, i32
  }
  func.func @transform_2(%arg0: i32, %arg1: i32) -> (i32, i32) {
    %c0_i32 = arith.constant 0 : i32
    %c0_i32_0 = arith.constant 0 : i32
    %c0_i32_1 = arith.constant 0 : i32
    return %c0_i32, %c0_i32_0 : i32, i32
  }
  func.func @transform_3(%arg0: i32, %arg1: i32) -> (i32, i32) {
    %c0_i32 = arith.constant 0 : i32
    %c0_i32_0 = arith.constant 0 : i32
    return %arg0, %c0_i32 : i32, i32
  }
  func.func @transform_4(%arg0: i32, %arg1: i32) -> (i32, i32) {
    %c0_i32 = arith.constant 0 : i32
    %c0_i32_0 = arith.constant 0 : i32
    %c0_i32_1 = arith.constant 0 : i32
    return %c0_i32, %c0_i32_0 : i32, i32
  }
  func.func @transform_5(%arg0: i32, %arg1: i32) -> (i32, i32) {
    %c0_i32 = arith.constant 0 : i32
    %c0_i32_0 = arith.constant 0 : i32
    %c0_i32_1 = arith.constant 0 : i32
    return %c0_i32, %c0_i32_0 : i32, i32
  }
  func.func @transform_6(%arg0: i32, %arg1: i32) -> (i32, i32) {
    %c0_i32 = arith.constant 0 : i32
    %c0_i32_0 = arith.constant 0 : i32
    return %arg0, %c0_i32 : i32, i32
  }
}

module attributes {stable_mosaic.version = 11 : i64} {
  func.func @_linear_kernel(%arg0: i32, %arg1: i32, %arg2: i32, %arg3: memref<16x128xf32, #tpu.memory_space<vmem>>, %arg4: memref<128x256xbf16, #tpu.memory_space<vmem>>, %arg5: memref<1x256xf32, #tpu.memory_space<vmem>>, %arg6: memref<16x256xf32, #tpu.memory_space<vmem>>, %arg7: memref<16x256xf32, #tpu.memory_space<vmem>>) attributes {dimension_semantics = [#tpu.dimension_semantics<parallel>, #tpu.dimension_semantics<parallel>, #tpu.dimension_semantics<arbitrary>], iteration_bounds = array<i64: 1, 1, 1>, scalar_prefetch = 0 : i64, scratch_operands = 1 : i64, tpu.core_type = #tpu.core_type<tc>, window_params = [{transform_indices = @transform_0, window_bounds = array<i64: 16, 128>}, {transform_indices = @transform_1, window_bounds = array<i64: 128, 256>}, {transform_indices = @transform_2, window_bounds = array<i64: 1, 256>}, {transform_indices = @transform_3, window_bounds = array<i64: 16, 256>}]} {
    %c0_i32 = arith.constant 0 : i32
    %0 = arith.cmpi eq, %arg2, %c0_i32 : i32
    %1 = arith.extui %0 : i1 to i32
    %c0_i32_0 = arith.constant 0 : i32
    %2 = arith.cmpi ne, %1, %c0_i32_0 : i32
    scf.if %2 {
      %cst_10 = arith.constant 0.000000e+00 : f32
      %13 = vector.broadcast %cst_10 : f32 to vector<16x256xf32>
      %c0_11 = arith.constant 0 : index
      %c0_12 = arith.constant 0 : index
      %14 = vector.load %arg7[%c0_11, %c0_12] : memref<16x256xf32, #tpu.memory_space<vmem>>, vector<16x256xf32>
      tpu.vector_store %arg7[%c0_11, %c0_12], %13 {strides = array<i32>} : memref<16x256xf32, #tpu.memory_space<vmem>>, vector<16x256xf32>,
    } else {
    }
    %c0 = arith.constant 0 : index
    %c0_1 = arith.constant 0 : index
    %3 = vector.load %arg7[%c0, %c0_1] : memref<16x256xf32, #tpu.memory_space<vmem>>, vector<16x256xf32>
    %c0_2 = arith.constant 0 : index
    %c0_3 = arith.constant 0 : index
    %4 = vector.load %arg3[%c0_2, %c0_3] : memref<16x128xf32, #tpu.memory_space<vmem>>, vector<16x128xf32>
    %5 = arith.truncf %4 : vector<16x128xf32> to vector<16x128xbf16>
    %c0_4 = arith.constant 0 : index
    %c0_5 = arith.constant 0 : index
    %6 = vector.load %arg4[%c0_4, %c0_5] : memref<128x256xbf16, #tpu.memory_space<vmem>>, vector<128x256xbf16>
    %cst = arith.constant dense<0.000000e+00> : vector<16x256xf32>
    %7 = tpu.matmul %5, %6, %cst {dimension_numbers = #tpu.dot_dimension_numbers<[1], [0], [0], [1], [0, 0, 1, 1], [], []>} : vector<16x128xbf16>, vector<128x256xbf16>, vector<16x256xf32> -> vector<16x256xf32>
    %8 = arith.addf %3, %7 : vector<16x256xf32>
    %c0_6 = arith.constant 0 : index
    %c0_7 = arith.constant 0 : index
    %9 = vector.load %arg7[%c0_6, %c0_7] : memref<16x256xf32, #tpu.memory_space<vmem>>, vector<16x256xf32>
    tpu.vector_store %arg7[%c0_6, %c0_7], %8 {strides = array<i32>} : memref<16x256xf32, #tpu.memory_space<vmem>>, vector<16x256xf32>,
    %c0_i32_8 = arith.constant 0 : i32
    %10 = arith.cmpi eq, %arg2, %c0_i32_8 : i32
    %11 = arith.extui %10 : i1 to i32
    %c0_i32_9 = arith.constant 0 : i32
    %12 = arith.cmpi ne, %11, %c0_i32_9 : i32
    scf.if %12 {
      %c0_10 = arith.constant 0 : index
      %c0_11 = arith.constant 0 : index
      %13 = vector.load %arg7[%c0_10, %c0_11] : memref<16x256xf32, #tpu.memory_space<vmem>>, vector<16x256xf32>
      %c0_12 = arith.constant 0 : index
      %c0_13 = arith.constant 0 : index
      %14 = vector.load %arg5[%c0_12, %c0_13] : memref<1x256xf32, #tpu.memory_space<vmem>>, vector<1x256xf32>
      %15 = vector.broadcast %14 : vector<1x256xf32> to vector<16x256xf32>
      %16 = arith.addf %13, %15 : vector<16x256xf32>
      %cst_14 = arith.constant 0.000000e+00 : f32
      %17 = vector.broadcast %cst_14 : f32 to vector<16x256xf32>
      %18 = arith.maximumf %16, %17 : vector<16x256xf32>
      %c0_15 = arith.constant 0 : index
      %c0_16 = arith.constant 0 : index
      %19 = vector.load %arg6[%c0_15, %c0_16] : memref<16x256xf32, #tpu.memory_space<vmem>>, vector<16x256xf32>
      tpu.vector_store %arg6[%c0_15, %c0_16], %18 {strides = array<i32>} : memref<16x256xf32, #tpu.memory_space<vmem>>, vector<16x256xf32>,
    } else {
    }
    return
  }
  func.func @transform_0(%arg0: i32, %arg1: i32, %arg2: i32) -> (i32, i32) {
    %c0_i32 = arith.constant 0 : i32
    return %arg0, %arg2 : i32, i32
  }
  func.func @transform_1(%arg0: i32, %arg1: i32, %arg2: i32) -> (i32, i32) {
    %c0_i32 = arith.constant 0 : i32
    return %arg2, %arg1 : i32, i32
  }
  func.func @transform_2(%arg0: i32, %arg1: i32, %arg2: i32) -> (i32, i32) {
    %c0_i32 = arith.constant 0 : i32
    %c0_i32_0 = arith.constant 0 : i32
    return %c0_i32, %arg1 : i32, i32
  }
  func.func @transform_3(%arg0: i32, %arg1: i32, %arg2: i32) -> (i32, i32) {
    %c0_i32 = arith.constant 0 : i32
    return %arg0, %arg1 : i32, i32
  }
}

</mosaic_0001>

<llo_original>
// kernel: transformer_decoder.23
$region0: #{transformer_decoder.23}
  #allocation0 [shape = 'u32[]', space=smem, size = 0x4, offset = 0x4, fixed_abs, tag = 'smem constant byte address 0x4 - core index']
  #allocation1 [shape = 'u32[72,128]{1,0:T(1,128)}', space=vmem, size = 0x9000, scoped, tag = 'internal scratch']
  #allocation2 [shape = 'f32[16,128]{1,0:T(8,128)}', space=vmem, size = 0x2000, scoped, tag = 'scratch operand']
  %s0 = inlined_call_operand.vmem [shape: f32[16,128], index: 0, kind: input, shape index: {}]
  %s1 = inlined_call_operand.hbm [shape: bf16[128,128], index: 1, kind: input, shape index: {}]
  %s2 = inlined_call_operand.vmem [shape: f32[1,128], index: 2, kind: input, shape index: {}]
  %s3 = inlined_call_operand.vmem [shape: f32[16,128], index: 3, kind: output, shape index: {}]
  %s4 = sld [smem:[#allocation0]]
  $region34: #{transformer_decoder.23} parent=0
    _
  %s6 = ssub.s32 1, %s4
  %s7 = scalar_select 0, %s6, %s4
  $region1: #{transformer_decoder.23} parent=0
    #allocation3 [shape = 'u8[32768]{0}', space=vmem, size = 0x8000, scoped, tag = 'input window, operand 1, single buffered']
    #allocation4 [shape = 's32[1]{0}', space=sflag, size = 0x4, scoped, tag = 'scoped memory for transformer_decoder.23']
    %8 = vsyncpa [#allocation4], 0
    // Predicated region
    $region2: #{transformer_decoder.23} parent=1 // pred_check
      _
    $region3: #{transformer_decoder.23} parent=1 // pred_check_branch
      %10 = sbr.rel (0) target = $region5
    $region4: #{transformer_decoder.23} parent=1 // pred_region
      _
    $region5: #{transformer_decoder.23} parent=1 // pred_fallthru
      _
    // Predicated region
    $region6: #{transformer_decoder.23} parent=1 // pred_check
      _
    $region7: #{transformer_decoder.23} parent=1 // pred_check_branch
      %12 = sbr.rel (0) target = $region9
    $region8: #{transformer_decoder.23} parent=1 // pred_region
      %14 = vsyncadd [#allocation4], 0
      %s15 = sshll.u32 %s1, 4
      %s16 = int_to_ptr.hbm [resolvable:$true] %s15
      %s17 = sshll.u32 [#allocation3], 4
      %s18 = int_to_ptr.vmem [resolvable:$true] %s17
      %23 = dma.hbm_to_vmem [thread:$0]  %s16, 1024, %s18, [#allocation4], 64, 64, 4
    $region9: #{transformer_decoder.23} parent=1 // pred_fallthru
      _
    // Predicated region
    $region10: #{transformer_decoder.23} parent=1 // pred_check
      _
    $region11: #{transformer_decoder.23} parent=1 // pred_check_branch
      %25 = sbr.rel (0) target = $region13
    $region12: #{transformer_decoder.23} parent=1 // pred_region
      _
    $region13: #{transformer_decoder.23} parent=1 // pred_fallthru
      _
    // Predicated region
    $region14: #{transformer_decoder.23} parent=1 // pred_check
      _
    $region15: #{transformer_decoder.23} parent=1 // pred_check_branch
      %27 = sbr.rel (0) target = $region17
    $region16: #{transformer_decoder.23} parent=1 // pred_region
      %29 = dma.done [#allocation4], 1024
    $region17: #{transformer_decoder.23} parent=1 // pred_fallthru
      _
    %p30 = scmp.eq.s32.totalorder 0, 0
    // Predicated region
    $region18: #{transformer_decoder.23} parent=1 // pred_check
      %p31 = pneg %p30
    $region19: #{transformer_decoder.23} parent=1 // pred_check_branch
      %33 = sbr.rel (%p31) target = $region21
    $region20: #{transformer_decoder.23} parent=1 // pred_region
      %34 = vst [vmem:[#allocation2] sm:$0xff] 0.0
      %35 = vst [vmem:[#allocation2 + $0x8] sm:$0xff] 0.0
    $region21: #{transformer_decoder.23} parent=1 // pred_fallthru
      _
    %v36 = vld [vmem:[#allocation2] sm:$0xff]
    %v37 = vld [vmem:[#allocation2 + $0x8] sm:$0xff]
    %v38 = vld [vmem:[%s0] sm:$0xff]
    %v39 = vld [vmem:[%s0 + $0x8] sm:$0xff]
    %v40 = vpack.c.bf16 %v39, %v38
    %v41 = vld [vmem:[#allocation3] sm:$0xf]
    %v42 = vld [vmem:[#allocation3 + $0x4] sm:$0xf]
    %v43 = vld [vmem:[#allocation3 + $0x8] sm:$0xf]
    %v44 = vld [vmem:[#allocation3 + $0xc] sm:$0xf]
    %v45 = vld [vmem:[#allocation3 + $0x10] sm:$0xf]
    %v46 = vld [vmem:[#allocation3 + $0x14] sm:$0xf]
    %v47 = vld [vmem:[#allocation3 + $0x18] sm:$0xf]
    %v48 = vld [vmem:[#allocation3 + $0x1c] sm:$0xf]
    %v49 = vld [vmem:[#allocation3 + $0x20] sm:$0xf]
    %v50 = vld [vmem:[#allocation3 + $0x24] sm:$0xf]
    %v51 = vld [vmem:[#allocation3 + $0x28] sm:$0xf]
    %v52 = vld [vmem:[#allocation3 + $0x2c] sm:$0xf]
    %v53 = vld [vmem:[#allocation3 + $0x30] sm:$0xf]
    %v54 = vld [vmem:[#allocation3 + $0x34] sm:$0xf]
    %v55 = vld [vmem:[#allocation3 + $0x38] sm:$0xf]
    %v56 = vld [vmem:[#allocation3 + $0x3c] sm:$0xf]
    %v73 = vunpack.c.l.b16 %v41
    %v74 = vunpack.c.l.b16 %v42
    %v75 = vunpack.c.l.b16 %v43
    %v76 = vunpack.c.l.b16 %v44
    %v77 = vunpack.c.l.b16 %v45
    %v78 = vunpack.c.l.b16 %v46
    %v79 = vunpack.c.l.b16 %v47
    %v80 = vunpack.c.l.b16 %v48
    %v81 = vunpack.c.l.b16 %v49
    %v82 = vunpack.c.l.b16 %v50
    %v83 = vunpack.c.l.b16 %v51
    %v84 = vunpack.c.l.b16 %v52
    %v85 = vunpack.c.l.b16 %v53
    %v86 = vunpack.c.l.b16 %v54
    %v87 = vunpack.c.l.b16 %v55
    %v88 = vunpack.c.l.b16 %v56
    %v89 = vpack.c.b16 %v74, %v73
    %v90 = vpack.c.b16 %v76, %v75
    %v91 = vpack.c.b16 %v78, %v77
    %v92 = vpack.c.b16 %v80, %v79
    %v93 = vpack.c.b16 %v82, %v81
    %v94 = vpack.c.b16 %v84, %v83
    %v95 = vpack.c.b16 %v86, %v85
    %v96 = vpack.c.b16 %v88, %v87
    %105 = vmatpush.bf16.msra.mxu0 %v96
    %106 = vmatpush.bf16.msra.mxu0 %v95
    %107 = vmatpush.bf16.msra.mxu0 %v94
    %108 = vmatpush.bf16.msra.mxu0 %v93
    %109 = vmatpush.bf16.msra.mxu0 %v92
    %110 = vmatpush.bf16.msra.mxu0 %v91
    %111 = vmatpush.bf16.msra.mxu0 %v90
    %112 = vmatpush.bf16.msra.mxu0 %v89
    %113 = vmatmul.bf16.gmra.mxu0 %v40
    %v114 = vpop.f32.mrf.mxu0
    %v115 = vadd.f32 0.0, %v114
    %v116 = vpop.f32.mrf.mxu0
    %v117 = vadd.f32 0.0, %v116
    %118 = vdwg.mxu0
    %v119 = vadd.f32 %v36, %v115
    %v120 = vadd.f32 %v37, %v117
    %121 = vst [vmem:[#allocation2] sm:$0xff] %v119
    %122 = vst [vmem:[#allocation2 + $0x8] sm:$0xff] %v120
    // Predicated region
    $region22: #{transformer_decoder.23} parent=1 // pred_check
      %p123 = pneg %p30
    $region23: #{transformer_decoder.23} parent=1 // pred_check_branch
      %125 = sbr.rel (%p123) target = $region25
    $region24: #{transformer_decoder.23} parent=1 // pred_region
      %v126 = vld [vmem:[#allocation2] sm:$0xff]
      %v127 = vld [vmem:[#allocation2 + $0x8] sm:$0xff]
      %v128 = vld [vmem:[%s2] sm:$0x1]
      %v130 = vperm.slane %v128, 0
      %v132 = vadd.f32 %v126, %v130
      %v133 = vadd.f32 %v127, %v130
      %134 = vst [vmem:[%s3] sm:$0xff] %v132
      %135 = vst [vmem:[%s3 + $0x8] sm:$0xff] %v133
    $region25: #{transformer_decoder.23} parent=1 // pred_fallthru
      _
    // Predicated region
    $region26: #{transformer_decoder.23} parent=1 // pred_check
      _
    $region27: #{transformer_decoder.23} parent=1 // pred_check_branch
      %137 = sbr.rel (0) target = $region29
    $region28: #{transformer_decoder.23} parent=1 // pred_region
      _
    $region29: #{transformer_decoder.23} parent=1 // pred_fallthru
      _
    // Predicated region
    $region30: #{transformer_decoder.23} parent=1 // pred_check
      _
    $region31: #{transformer_decoder.23} parent=1 // pred_check_branch
      %139 = sbr.rel (0) target = $region33
    $region32: #{transformer_decoder.23} parent=1 // pred_region
      _
    $region33: #{transformer_decoder.23} parent=1 // pred_fallthru
      _
    %140 = vsyncpa [#allocation4], 1

// kernel: transformer_decoder.17
$region0: #{transformer_decoder.17}
  #allocation0 [shape = 'u32[]', space=smem, size = 0x4, offset = 0x4, fixed_abs, tag = 'smem constant byte address 0x4 - core index']
  #allocation1 [shape = 'u32[72,128]{1,0:T(1,128)}', space=vmem, size = 0x9000, scoped, tag = 'internal scratch']
  %s0 = inlined_call_operand.vmem [shape: f32[2,8,128], index: 0, kind: input, shape index: {}]
  %s1 = inlined_call_operand.vmem [shape: f32[2,8,128], index: 1, kind: input, shape index: {}]
  %s2 = inlined_call_operand.vmem [shape: f32[2,8,128], index: 2, kind: input, shape index: {}]
  %s3 = inlined_call_operand.vmem [shape: f32[2,1,8], index: 3, kind: input, shape index: {}]
  %s4 = inlined_call_operand.vmem [shape: f32[2,8,128], index: 4, kind: output, shape index: {0}]
  %s5 = inlined_call_operand.vmem [shape: f32[2,8,8], index: 5, kind: output, shape index: {1}]
  %6 = xla_tuple %s4, %s5
  %s7 = sld [smem:[#allocation0]]
  $region57: #{transformer_decoder.17} parent=0
    _
  %s9 = ssub.s32 1, %s7
  %s10 = scalar_select 0, %s9, %s7
  loop: start=0, step=1, limit=4
  $region2: #{transformer_decoder.17} parent=0 // loop_pre_header
    _
  $region3: #{transformer_decoder.17} parent=0 // loop_header
    %s12 = sphi 0, %s16
    %p13 = scmp.ge.s32.totalorder %s12, 4
    %s19 = sphi 0, %s31
    %s20 = sphi 0, %s27
    %s21 = sphi 0, %s19
    %s22 = sphi 0, %s20
    %s23 = sphi 0, %s21
    %s24 = sphi 0, %s22
    %s36 = sphi 0, %s38
    %s39 = sphi 0, %s36
    %s40 = sphi 0, %s39
    %s56 = sphi 0, %s40
    %s62 = sphi 0, %s64
    %s65 = sphi 0, %s62
    %s66 = sphi 0, %s65
    %s82 = sphi 0, %s66
    %s88 = sphi 0, %s90
    %s91 = sphi 0, %s88
    %s92 = sphi 0, %s91
    %s108 = sphi 0, %s92
    %s114 = sphi 0, %s116
    %s117 = sphi 0, %s114
    %s118 = sphi 0, %s117
    %s134 = sphi 0, %s118
    %s142 = sphi 0, %s144
    %s145 = sphi 0, %s142
    %s146 = sphi 0, %s145
    %s162 = sphi 0, %s146
    %s170 = sphi 0, %s172
    %s173 = sphi 0, %s170
    %s174 = sphi 0, %s173
    %s190 = sphi 0, %s174
  $region4: #{transformer_decoder.17} parent=0 // loop_header_branch
    %15 = sbr.rel (%p13) target = $region8
  $region5: #{transformer_decoder.17} parent=0 // loop_body
    %s17 = ssub.s32 %s12, 1
    %s18 = ssub.s32 %s12, 2
    %s25 = sadd.s32 1, %s20
    %p26 = scmp.ge.s32.totalorder %s25, 1
    %s27 = scalar_select %p26, 0, %s25
    %s28 = sadd.s32 1, %s19
    %s29 = scalar_select %p26, %s28, %s19
    %p30 = scmp.ge.s32.totalorder %s29, 2
    %s31 = scalar_select %p30, 0, %s29
    %s32 = ssub.s32 %s19, %s31
    %s33 = ssub.s32 %s20, %s27
    %s34 = sor.u32 %s32, %s33
    %p35 = scmp.eq.s32.totalorder %s34, 0
    %s37 = sadd.s32 %s36, 1
    %s38 = scalar_select %p35, %s36, %s37
    %p41 = pneg %p35
    %p42 = scmp.eq.s32.totalorder %s12, 1
    %p43 = por %p41, %p42
    %p44 = scmp.ne.s32.totalorder %s36, %s39
    %p45 = scmp.eq.s32.totalorder %s12, 0
    %p46 = por %p44, %p45
    %p47 = scmp.ne.s32.totalorder %s36, %s39
    %p48 = scmp.eq.s32.totalorder %s17, 1
    %p49 = por %p47, %p48
    %p50 = scmp.ne.s32.totalorder %s39, %s40
    %p51 = scmp.eq.s32.totalorder %s17, 0
    %p52 = por %p50, %p51
    %p53 = scmp.ne.s32.totalorder %s39, %s40
    %p54 = scmp.eq.s32.totalorder %s18, 1
    %p55 = por %p53, %p54
    %p57 = scmp.ne.s32.totalorder %s40, %s56
    %p58 = scmp.eq.s32.totalorder %s18, 0
    %p59 = por %p57, %p58
    %s60 = ssub.s32 %s19, %s31
    %p61 = scmp.eq.s32.totalorder %s60, 0
    %s63 = sadd.s32 %s62, 1
    %s64 = scalar_select %p61, %s62, %s63
    %p67 = pneg %p61
    %p68 = scmp.eq.s32.totalorder %s12, 1
    %p69 = por %p67, %p68
    %p70 = scmp.ne.s32.totalorder %s62, %s65
    %p71 = scmp.eq.s32.totalorder %s12, 0
    %p72 = por %p70, %p71
    %p73 = scmp.ne.s32.totalorder %s62, %s65
    %p74 = scmp.eq.s32.totalorder %s17, 1
    %p75 = por %p73, %p74
    %p76 = scmp.ne.s32.totalorder %s65, %s66
    %p77 = scmp.eq.s32.totalorder %s17, 0
    %p78 = por %p76, %p77
    %p79 = scmp.ne.s32.totalorder %s65, %s66
    %p80 = scmp.eq.s32.totalorder %s18, 1
    %p81 = por %p79, %p80
    %p83 = scmp.ne.s32.totalorder %s66, %s82
    %p84 = scmp.eq.s32.totalorder %s18, 0
    %p85 = por %p83, %p84
    %s86 = ssub.s32 %s19, %s31
    %p87 = scmp.eq.s32.totalorder %s86, 0
    %s89 = sadd.s32 %s88, 1
    %s90 = scalar_select %p87, %s88, %s89
    %p93 = pneg %p87
    %p94 = scmp.eq.s32.totalorder %s12, 1
    %p95 = por %p93, %p94
    %p96 = scmp.ne.s32.totalorder %s88, %s91
    %p97 = scmp.eq.s32.totalorder %s12, 0
    %p98 = por %p96, %p97
    %p99 = scmp.ne.s32.totalorder %s88, %s91
    %p100 = scmp.eq.s32.totalorder %s17, 1
    %p101 = por %p99, %p100
    %p102 = scmp.ne.s32.totalorder %s91, %s92
    %p103 = scmp.eq.s32.totalorder %s17, 0
    %p104 = por %p102, %p103
    %p105 = scmp.ne.s32.totalorder %s91, %s92
    %p106 = scmp.eq.s32.totalorder %s18, 1
    %p107 = por %p105, %p106
    %p109 = scmp.ne.s32.totalorder %s92, %s108
    %p110 = scmp.eq.s32.totalorder %s18, 0
    %p111 = por %p109, %p110
    %s112 = ssub.s32 %s19, %s31
    %p113 = scmp.eq.s32.totalorder %s112, 0
    %s115 = sadd.s32 %s114, 1
    %s116 = scalar_select %p113, %s114, %s115
    %p119 = pneg %p113
    %p120 = scmp.eq.s32.totalorder %s12, 1
    %p121 = por %p119, %p120
    %p122 = scmp.ne.s32.totalorder %s114, %s117
    %p123 = scmp.eq.s32.totalorder %s12, 0
    %p124 = por %p122, %p123
    %p125 = scmp.ne.s32.totalorder %s114, %s117
    %p126 = scmp.eq.s32.totalorder %s17, 1
    %p127 = por %p125, %p126
    %p128 = scmp.ne.s32.totalorder %s117, %s118
    %p129 = scmp.eq.s32.totalorder %s17, 0
    %p130 = por %p128, %p129
    %p131 = scmp.ne.s32.totalorder %s117, %s118
    %p132 = scmp.eq.s32.totalorder %s18, 1
    %p133 = por %p131, %p132
    %p135 = scmp.ne.s32.totalorder %s118, %s134
    %p136 = scmp.eq.s32.totalorder %s18, 0
    %p137 = por %p135, %p136
    %s138 = ssub.s32 %s19, %s31
    %s139 = ssub.s32 %s20, %s27
    %s140 = sor.u32 %s138, %s139
    %p141 = scmp.eq.s32.totalorder %s140, 0
    %s143 = sadd.s32 %s142, 1
    %s144 = scalar_select %p141, %s142, %s143
    %p147 = pneg %p141
    %p148 = scmp.eq.s32.totalorder %s12, 1
    %p149 = por %p147, %p148
    %p150 = scmp.ne.s32.totalorder %s142, %s145
    %p151 = scmp.eq.s32.totalorder %s12, 0
    %p152 = por %p150, %p151
    %p153 = scmp.ne.s32.totalorder %s142, %s145
    %p154 = scmp.eq.s32.totalorder %s17, 1
    %p155 = por %p153, %p154
    %p156 = scmp.ne.s32.totalorder %s145, %s146
    %p157 = scmp.eq.s32.totalorder %s17, 0
    %p158 = por %p156, %p157
    %p159 = scmp.ne.s32.totalorder %s145, %s146
    %p160 = scmp.eq.s32.totalorder %s18, 1
    %p161 = por %p159, %p160
    %p163 = scmp.ne.s32.totalorder %s146, %s162
    %p164 = scmp.eq.s32.totalorder %s18, 0
    %p165 = por %p163, %p164
    %s166 = ssub.s32 %s19, %s31
    %s167 = ssub.s32 %s20, %s27
    %s168 = sor.u32 %s166, %s167
    %p169 = scmp.eq.s32.totalorder %s168, 0
    %s171 = sadd.s32 %s170, 1
    %s172 = scalar_select %p169, %s170, %s171
    %p175 = pneg %p169
    %p176 = scmp.eq.s32.totalorder %s12, 1
    %p177 = por %p175, %p176
    %p178 = scmp.ne.s32.totalorder %s170, %s173
    %p179 = scmp.eq.s32.totalorder %s12, 0
    %p180 = por %p178, %p179
    %p181 = scmp.ne.s32.totalorder %s170, %s173
    %p182 = scmp.eq.s32.totalorder %s17, 1
    %p183 = por %p181, %p182
    %p184 = scmp.ne.s32.totalorder %s173, %s174
    %p185 = scmp.eq.s32.totalorder %s17, 0
    %p186 = por %p184, %p185
    %p187 = scmp.ne.s32.totalorder %s173, %s174
    %p188 = scmp.eq.s32.totalorder %s18, 1
    %p189 = por %p187, %p188
    %p191 = scmp.ne.s32.totalorder %s174, %s190
    %p192 = scmp.eq.s32.totalorder %s18, 0
    %p193 = por %p191, %p192
    %p194 = scmp.le.s32.totalorder 1, %s12
    %p195 = scmp.lt.s32.totalorder %s12, 3
    %p196 = pnand %p194, %p195
    %p197 = pneg %p196
    // Predicated region
    $region9: #{transformer_decoder.17} parent=5 // pred_check
      _
    $region10: #{transformer_decoder.17} parent=5 // pred_check_branch
      %199 = sbr.rel (%p196) target = $region12
    $region11: #{transformer_decoder.17} parent=5 // pred_region
      %s200 = ssub.s32 %s12, 1
    $region12: #{transformer_decoder.17} parent=5 // pred_fallthru
      _
    %p201 = scmp.lt.s32.totalorder %s12, 2
    // Predicated region
    $region13: #{transformer_decoder.17} parent=5 // pred_check
      %p202 = pneg %p201
    $region14: #{transformer_decoder.17} parent=5 // pred_check_branch
      %204 = sbr.rel (%p202) target = $region16
    $region15: #{transformer_decoder.17} parent=5 // pred_region
      // Predicated region
      $region17: #{transformer_decoder.17} parent=15 // pred_check
        %p205 = pneg %p46
      $region18: #{transformer_decoder.17} parent=15 // pred_check_branch
        %207 = sbr.rel (%p205) target = $region20
      $region19: #{transformer_decoder.17} parent=15 // pred_region
        %p208 = scmp.lt.s32.totalorder %s19, 1
        %s209 = scalar_select %p208, %s19, 1
        %p210 = scmp.lt.s32.totalorder %s20, 0
        %s211 = scalar_select %p210, %s20, 0
        %s212 = sadd.s32 %s211, %s209
        %s213 = smul.addr %s212, 8
        %s214 = scalar_lea.vmem %s0, %s213
      $region20: #{transformer_decoder.17} parent=15 // pred_fallthru
        _
      // Predicated region
      $region21: #{transformer_decoder.17} parent=15 // pred_check
        %p215 = pneg %p72
      $region22: #{transformer_decoder.17} parent=15 // pred_check_branch
        %217 = sbr.rel (%p215) target = $region24
      $region23: #{transformer_decoder.17} parent=15 // pred_region
        %p218 = scmp.lt.s32.totalorder %s19, 1
        %s219 = scalar_select %p218, %s19, 1
        %s220 = smul.addr %s219, 8
        %s221 = scalar_lea.vmem %s1, %s220
      $region24: #{transformer_decoder.17} parent=15 // pred_fallthru
        _
      // Predicated region
      $region25: #{transformer_decoder.17} parent=15 // pred_check
        %p222 = pneg %p98
      $region26: #{transformer_decoder.17} parent=15 // pred_check_branch
        %224 = sbr.rel (%p222) target = $region28
      $region27: #{transformer_decoder.17} parent=15 // pred_region
        %p225 = scmp.lt.s32.totalorder %s19, 1
        %s226 = scalar_select %p225, %s19, 1
        %s227 = smul.addr %s226, 8
        %s228 = scalar_lea.vmem %s2, %s227
      $region28: #{transformer_decoder.17} parent=15 // pred_fallthru
        _
      // Predicated region
      $region29: #{transformer_decoder.17} parent=15 // pred_check
        %p229 = pneg %p124
      $region30: #{transformer_decoder.17} parent=15 // pred_check_branch
        %231 = sbr.rel (%p229) target = $region32
      $region31: #{transformer_decoder.17} parent=15 // pred_region
        %p232 = scmp.lt.s32.totalorder %s19, 1
        %s233 = scalar_select %p232, %s19, 1
        %s234 = scalar_lea.vmem %s3, %s233
      $region32: #{transformer_decoder.17} parent=15 // pred_fallthru
        _
    $region16: #{transformer_decoder.17} parent=5 // pred_fallthru
      _
    %p235 = scmp.le.s32.totalorder 1, %s12
    %p236 = scmp.lt.s32.totalorder %s12, 3
    %p237 = pnand %p235, %p236
    %p238 = pneg %p237
    // Predicated region
    $region33: #{transformer_decoder.17} parent=5 // pred_check
      _
    $region34: #{transformer_decoder.17} parent=5 // pred_check_branch
      %240 = sbr.rel (%p237) target = $region36
    $region35: #{transformer_decoder.17} parent=5 // pred_region
      %s241 = ssub.s32 %s12, 1
      %p242 = scmp.lt.s32.totalorder %s21, 1
      %s243 = scalar_select %p242, %s21, 1
      %p244 = scmp.lt.s32.totalorder %s22, 0
      %s245 = scalar_select %p244, %s22, 0
      %s246 = sadd.s32 %s245, %s243
      %s247 = smul.addr %s246, 8
      %s248 = scalar_lea.vmem %s0, %s247
      %p249 = pneg %p52
      %p250 = pneg %p49
      %p251 = scmp.lt.s32.totalorder %s21, 1
      %s252 = scalar_select %p251, %s21, 1
      %s253 = smul.addr %s252, 8
      %s254 = scalar_lea.vmem %s1, %s253
      %p255 = pneg %p78
      %p256 = pneg %p75
      %p257 = scmp.lt.s32.totalorder %s21, 1
      %s258 = scalar_select %p257, %s21, 1
      %s259 = smul.addr %s258, 8
      %s260 = scalar_lea.vmem %s2, %s259
      %p261 = pneg %p104
      %p262 = pneg %p101
      %p263 = scmp.lt.s32.totalorder %s21, 1
      %s264 = scalar_select %p263, %s21, 1
      %s265 = scalar_lea.vmem %s3, %s264
      %p266 = pneg %p130
      %p267 = pneg %p127
      %p268 = pneg %p158
      %p269 = pneg %p155
      %p270 = scmp.lt.s32.totalorder %s21, 1
      %s271 = scalar_select %p270, %s21, 1
      %p272 = scmp.lt.s32.totalorder %s22, 0
      %s273 = scalar_select %p272, %s22, 0
      %s274 = sadd.s32 %s273, %s271
      %s275 = smul.addr %s274, 8
      %s276 = scalar_lea.vmem %s4, %s275
      %p277 = pneg %p186
      %p278 = pneg %p183
      %p279 = scmp.lt.s32.totalorder %s21, 1
      %s280 = scalar_select %p279, %s21, 1
      %p281 = scmp.lt.s32.totalorder %s22, 0
      %s282 = scalar_select %p281, %s22, 0
      %s283 = sadd.s32 %s282, %s280
      %s284 = smul.addr %s283, 8
      %s285 = scalar_lea.vmem %s5, %s284
      %p286 = scmp.lt.s32.totalorder %s21, 1
      %s287 = scalar_select %p286, %s21, 1
      %p288 = scmp.lt.s32.totalorder %s22, 0
      %s289 = scalar_select %p288, %s22, 0
      %s290 = sadd.s32 %s289, %s287
      %s291 = smul.addr %s290, 8
      %s292 = scalar_lea.vmem %s0, %s291
      %p293 = scmp.lt.s32.totalorder %s21, 1
      %s294 = scalar_select %p293, %s21, 1
      %s295 = smul.addr %s294, 8
      %s296 = scalar_lea.vmem %s1, %s295
      %p297 = scmp.lt.s32.totalorder %s21, 1
      %s298 = scalar_select %p297, %s21, 1
      %s299 = smul.addr %s298, 8
      %s300 = scalar_lea.vmem %s2, %s299
      %p301 = scmp.lt.s32.totalorder %s21, 1
      %s302 = scalar_select %p301, %s21, 1
      %s303 = scalar_lea.vmem %s3, %s302
      %p304 = scmp.lt.s32.totalorder %s21, 1
      %s305 = scalar_select %p304, %s21, 1
      %p306 = scmp.lt.s32.totalorder %s22, 0
      %s307 = scalar_select %p306, %s22, 0
      %s308 = sadd.s32 %s307, %s305
      %s309 = smul.addr %s308, 8
      %s310 = scalar_lea.vmem %s4, %s309
      %p311 = scmp.lt.s32.totalorder %s21, 1
      %s312 = scalar_select %p311, %s21, 1
      %p313 = scmp.lt.s32.totalorder %s22, 0
      %s314 = scalar_select %p313, %s22, 0
      %s315 = sadd.s32 %s314, %s312
      %s316 = smul.addr %s315, 8
      %s317 = scalar_lea.vmem %s5, %s316
      %v319 = vld [vmem:[%s292] sm:$0xff]
      %v320 = vld [vmem:[%s296] sm:$0xff]
      %v321 = vld [vmem:[%s300] sm:$0xff]
      %v322 = vld [vmem:[%s303] sm:$0x1]
      %v323 = vpack.c.bf16 %v319, %v319
      %v324 = vpack.c.bf16 %v320, %v320
      %v325 = vpack.c.bf16 %v321, %v321
      %v327 = vperm.slane %v322, 0
      %vm329 = vcmask 261120
      %v331 = vsel %vm329, %v323, 0
      %v334 = vsel %vm329, %v324, 0
      %336 = vmatpush.bf16.xpose.msra.mxu0 0
      %337 = vmatpush.bf16.xpose.msra.mxu0 0
      %338 = vmatpush.bf16.xpose.msra.mxu0 0
      %339 = vmatpush.bf16.xpose.msra.mxu0 0
      %340 = vmatpush.bf16.xpose.msra.mxu0 0
      %341 = vmatpush.bf16.xpose.msra.mxu0 0
      %342 = vmatpush.bf16.xpose.msra.mxu0 0
      %343 = vmatpush.bf16.xpose.msra.mxu0 %v334
      %344 = vmatmul.bf16.gmra.mxu0 %v331
      %v345 = vpop.f32.mrf.mxu0
      %v346 = vadd.f32 %v327, %v345
      %v347 = vpop.f32.mrf.mxu0
      %348 = vdwg.mxu0
      %vm349 = vcmask 64512
      %v350 = vsel %vm349, %v346, -inf
      %351 = vmax.xlane.f32.xlu0 %v350
      %v352 = vpop.xlane.xlu0 %351
      %v353 = vsub.f32 %v346, %v352
      %v354 = vmul.f32 %v353, 1.442695
      %v355 = vpow.pop %v354
      %v356 = vsel %vm349, %v355, 0.0
      %357 = vadd.xlane.f32.xlu0 %v356
      %v358 = vpop.xlane.xlu0 %357
      %v359 = vrcp.pop %v358
      %v360 = vmul.f32 %v355, %v359
      %v361 = vpack.c.bf16 %v360, %v360
      %v363 = vsel %vm349, %v361, 0
      %vm365 = vcmask 1043456
      %v367 = vsel %vm365, %v325, 0
      %369 = vmatpush.bf16.msra.mxu0 0
      %370 = vmatpush.bf16.msra.mxu0 0
      %371 = vmatpush.bf16.msra.mxu0 0
      %372 = vmatpush.bf16.msra.mxu0 0
      %373 = vmatpush.bf16.msra.mxu0 0
      %374 = vmatpush.bf16.msra.mxu0 0
      %375 = vmatpush.bf16.msra.mxu0 0
      %376 = vmatpush.bf16.msra.mxu0 %v367
      %377 = vmatmul.bf16.gmra.mxu0 %v363
      %v378 = vpop.f32.mrf.mxu0
      %v379 = vadd.f32 0.0, %v378
      %v380 = vpop.f32.mrf.mxu0
      %381 = vdwg.mxu0
      %v382 = vadd.f32 %v360, 0.0
      %384 = vrot.lane.b32.xlu0 %v323, 96
      %v385 = vpop.permute.xlu0 %384
      %387 = vrot.lane.b32.xlu0 %v324, 96
      %v388 = vpop.permute.xlu0 %387
      %v390 = vsel %vm329, %v385, 0
      %v393 = vsel %vm329, %v388, 0
      %395 = vmatpush.bf16.xpose.msra.mxu0 0
      %396 = vmatpush.bf16.xpose.msra.mxu0 0
      %397 = vmatpush.bf16.xpose.msra.mxu0 0
      %398 = vmatpush.bf16.xpose.msra.mxu0 0
      %399 = vmatpush.bf16.xpose.msra.mxu0 0
      %400 = vmatpush.bf16.xpose.msra.mxu0 0
      %401 = vmatpush.bf16.xpose.msra.mxu0 0
      %402 = vmatpush.bf16.xpose.msra.mxu0 %v393
      %403 = vmatmul.bf16.gmra.mxu0 %v390
      %v404 = vpop.f32.mrf.mxu0
      %v405 = vadd.f32 %v327, %v404
      %v406 = vpop.f32.mrf.mxu0
      %407 = vdwg.mxu0
      %v408 = vsel %vm349, %v405, -inf
      %409 = vmax.xlane.f32.xlu0 %v408
      %v410 = vpop.xlane.xlu0 %409
      %v411 = vsub.f32 %v405, %v410
      %v412 = vmul.f32 %v411, 1.442695
      %v413 = vpow.pop %v412
      %v414 = vsel %vm349, %v413, 0.0
      %415 = vadd.xlane.f32.xlu0 %v414
      %v416 = vpop.xlane.xlu0 %415
      %v417 = vrcp.pop %v416
      %v418 = vmul.f32 %v413, %v417
      %v419 = vpack.c.bf16 %v418, %v418
      %421 = vrot.lane.b32.xlu0 %v325, 96
      %v422 = vpop.permute.xlu0 %421
      %v424 = vsel %vm349, %v419, 0
      %v427 = vsel %vm365, %v422, 0
      %429 = vmatpush.bf16.msra.mxu0 0
      %430 = vmatpush.bf16.msra.mxu0 0
      %431 = vmatpush.bf16.msra.mxu0 0
      %432 = vmatpush.bf16.msra.mxu0 0
      %433 = vmatpush.bf16.msra.mxu0 0
      %434 = vmatpush.bf16.msra.mxu0 0
      %435 = vmatpush.bf16.msra.mxu0 0
      %436 = vmatpush.bf16.msra.mxu0 %v427
      %437 = vmatmul.bf16.gmra.mxu0 %v424
      %v438 = vpop.f32.mrf.mxu0
      %v439 = vadd.f32 0.0, %v438
      %v440 = vpop.f32.mrf.mxu0
      %441 = vdwg.mxu0
      %v442 = vadd.f32 %v382, %v418
      %443 = vrot.lane.b32.xlu0 %v323, 64
      %v444 = vpop.permute.xlu0 %443
      %445 = vrot.lane.b32.xlu0 %v324, 64
      %v446 = vpop.permute.xlu0 %445
      %v448 = vsel %vm329, %v444, 0
      %v451 = vsel %vm329, %v446, 0
      %453 = vmatpush.bf16.xpose.msra.mxu0 0
      %454 = vmatpush.bf16.xpose.msra.mxu0 0
      %455 = vmatpush.bf16.xpose.msra.mxu0 0
      %456 = vmatpush.bf16.xpose.msra.mxu0 0
      %457 = vmatpush.bf16.xpose.msra.mxu0 0
      %458 = vmatpush.bf16.xpose.msra.mxu0 0
      %459 = vmatpush.bf16.xpose.msra.mxu0 0
      %460 = vmatpush.bf16.xpose.msra.mxu0 %v451
      %461 = vmatmul.bf16.gmra.mxu0 %v448
      %v462 = vpop.f32.mrf.mxu0
      %v463 = vadd.f32 %v327, %v462
      %v464 = vpop.f32.mrf.mxu0
      %465 = vdwg.mxu0
      %v466 = vsel %vm349, %v463, -inf
      %467 = vmax.xlane.f32.xlu0 %v466
      %v468 = vpop.xlane.xlu0 %467
      %v469 = vsub.f32 %v463, %v468
      %v470 = vmul.f32 %v469, 1.442695
      %v471 = vpow.pop %v470
      %v472 = vsel %vm349, %v471, 0.0
      %473 = vadd.xlane.f32.xlu0 %v472
      %v474 = vpop.xlane.xlu0 %473
      %v475 = vrcp.pop %v474
      %v476 = vmul.f32 %v471, %v475
      %v477 = vpack.c.bf16 %v476, %v476
      %478 = vrot.lane.b32.xlu0 %v325, 64
      %v479 = vpop.permute.xlu0 %478
      %v481 = vsel %vm349, %v477, 0
      %v484 = vsel %vm365, %v479, 0
      %486 = vmatpush.bf16.msra.mxu0 0
      %487 = vmatpush.bf16.msra.mxu0 0
      %488 = vmatpush.bf16.msra.mxu0 0
      %489 = vmatpush.bf16.msra.mxu0 0
      %490 = vmatpush.bf16.msra.mxu0 0
      %491 = vmatpush.bf16.msra.mxu0 0
      %492 = vmatpush.bf16.msra.mxu0 0
      %493 = vmatpush.bf16.msra.mxu0 %v484
      %494 = vmatmul.bf16.gmra.mxu0 %v481
      %v495 = vpop.f32.mrf.mxu0
      %v496 = vadd.f32 0.0, %v495
      %v497 = vpop.f32.mrf.mxu0
      %498 = vdwg.mxu0
      %v499 = vadd.f32 %v442, %v476
      %500 = vrot.lane.b32.xlu0 %v323, 32
      %v501 = vpop.permute.xlu0 %500
      %502 = vrot.lane.b32.xlu0 %v324, 32
      %v503 = vpop.permute.xlu0 %502
      %v505 = vsel %vm329, %v501, 0
      %v508 = vsel %vm329, %v503, 0
      %510 = vmatpush.bf16.xpose.msra.mxu0 0
      %511 = vmatpush.bf16.xpose.msra.mxu0 0
      %512 = vmatpush.bf16.xpose.msra.mxu0 0
      %513 = vmatpush.bf16.xpose.msra.mxu0 0
      %514 = vmatpush.bf16.xpose.msra.mxu0 0
      %515 = vmatpush.bf16.xpose.msra.mxu0 0
      %516 = vmatpush.bf16.xpose.msra.mxu0 0
      %517 = vmatpush.bf16.xpose.msra.mxu0 %v508
      %518 = vmatmul.bf16.gmra.mxu0 %v505
      %v519 = vpop.f32.mrf.mxu0
      %v520 = vadd.f32 %v327, %v519
      %v521 = vpop.f32.mrf.mxu0
      %522 = vdwg.mxu0
      %v523 = vsel %vm349, %v520, -inf
      %524 = vmax.xlane.f32.xlu0 %v523
      %v525 = vpop.xlane.xlu0 %524
      %v526 = vsub.f32 %v520, %v525
      %v527 = vmul.f32 %v526, 1.442695
      %v528 = vpow.pop %v527
      %v529 = vsel %vm349, %v528, 0.0
      %530 = vadd.xlane.f32.xlu0 %v529
      %v531 = vpop.xlane.xlu0 %530
      %v532 = vrcp.pop %v531
      %v533 = vmul.f32 %v528, %v532
      %v534 = vpack.c.bf16 %v533, %v533
      %535 = vrot.lane.b32.xlu0 %v325, 32
      %v536 = vpop.permute.xlu0 %535
      %v538 = vsel %vm349, %v534, 0
      %v541 = vsel %vm365, %v536, 0
      %543 = vmatpush.bf16.msra.mxu0 0
      %544 = vmatpush.bf16.msra.mxu0 0
      %545 = vmatpush.bf16.msra.mxu0 0
      %546 = vmatpush.bf16.msra.mxu0 0
      %547 = vmatpush.bf16.msra.mxu0 0
      %548 = vmatpush.bf16.msra.mxu0 0
      %549 = vmatpush.bf16.msra.mxu0 0
      %550 = vmatpush.bf16.msra.mxu0 %v541
      %551 = vmatmul.bf16.gmra.mxu0 %v538
      %v552 = vpop.f32.mrf.mxu0
      %v553 = vadd.f32 0.0, %v552
      %v554 = vpop.f32.mrf.mxu0
      %555 = vdwg.mxu0
      %v556 = vadd.f32 %v499, %v533
      %558 = vrot.lane.b32.xlu0 %v439, 32
      %v559 = vpop.permute.xlu0 %558
      %562 = vrot.lane.b32.xlu0 %v496, 64
      %v563 = vpop.permute.xlu0 %562
      %566 = vrot.lane.b32.xlu0 %v553, 96
      %v567 = vpop.permute.xlu0 %566
      %v569 = vsel %vm329, %v379, %v559
      %vm570 = vcmask 523264
      %v571 = vsel %vm570, %v569, %v563
      %vm572 = vcmask 785408
      %v573 = vsel %vm572, %v571, %v567
      %574 = vst [vmem:[%s310] sm:$0xff] %v573
      %v575 = vmul.f32 %v556, 0.25
      %576 = vst.msk [vmem:[%s317] sm:$0xff] %vm349, %v575
      %p577 = scmp.lt.s32.totalorder %s21, 1
      %s578 = scalar_select %p577, %s21, 1
      %p579 = scmp.lt.s32.totalorder %s22, 0
      %s580 = scalar_select %p579, %s22, 0
      %s581 = sadd.s32 %s580, %s578
      %s582 = smul.addr %s581, 8
      %s583 = scalar_lea.vmem %s4, %s582
      %p584 = scmp.lt.s32.totalorder %s21, 1
      %s585 = scalar_select %p584, %s21, 1
      %p586 = scmp.lt.s32.totalorder %s22, 0
      %s587 = scalar_select %p586, %s22, 0
      %s588 = sadd.s32 %s587, %s585
      %s589 = smul.addr %s588, 8
      %s590 = scalar_lea.vmem %s5, %s589
      // Predicated region
      $region37: #{transformer_decoder.17} parent=35 // pred_check
        %p591 = pneg %p155
      $region38: #{transformer_decoder.17} parent=35 // pred_check_branch
        %593 = sbr.rel (%p591) target = $region40
      $region39: #{transformer_decoder.17} parent=35 // pred_region
        _
      $region40: #{transformer_decoder.17} parent=35 // pred_fallthru
        _
      // Predicated region
      $region41: #{transformer_decoder.17} parent=35 // pred_check
        %p594 = pneg %p183
      $region42: #{transformer_decoder.17} parent=35 // pred_check_branch
        %596 = sbr.rel (%p594) target = $region44
      $region43: #{transformer_decoder.17} parent=35 // pred_region
        _
      $region44: #{transformer_decoder.17} parent=35 // pred_fallthru
        _
    $region36: #{transformer_decoder.17} parent=5 // pred_fallthru
      _
    %p597 = scmp.le.s32.totalorder 2, %s12
    // Predicated region
    $region45: #{transformer_decoder.17} parent=5 // pred_check
      %p598 = pneg %p597
    $region46: #{transformer_decoder.17} parent=5 // pred_check_branch
      %600 = sbr.rel (%p598) target = $region48
    $region47: #{transformer_decoder.17} parent=5 // pred_region
      %s601 = ssub.s32 %s12, 2
      // Predicated region
      $region49: #{transformer_decoder.17} parent=47 // pred_check
        %p602 = pneg %p161
      $region50: #{transformer_decoder.17} parent=47 // pred_check_branch
        %604 = sbr.rel (%p602) target = $region52
      $region51: #{transformer_decoder.17} parent=47 // pred_region
        %p605 = scmp.lt.s32.totalorder %s23, 1
        %s606 = scalar_select %p605, %s23, 1
        %p607 = scmp.lt.s32.totalorder %s24, 0
        %s608 = scalar_select %p607, %s24, 0
        %s609 = sadd.s32 %s608, %s606
        %s610 = smul.addr %s609, 8
        %s611 = scalar_lea.vmem %s4, %s610
      $region52: #{transformer_decoder.17} parent=47 // pred_fallthru
        _
      // Predicated region
      $region53: #{transformer_decoder.17} parent=47 // pred_check
        %p612 = pneg %p189
      $region54: #{transformer_decoder.17} parent=47 // pred_check_branch
        %614 = sbr.rel (%p612) target = $region56
      $region55: #{transformer_decoder.17} parent=47 // pred_region
        %p615 = scmp.lt.s32.totalorder %s23, 1
        %s616 = scalar_select %p615, %s23, 1
        %p617 = scmp.lt.s32.totalorder %s24, 0
        %s618 = scalar_select %p617, %s24, 0
        %s619 = sadd.s32 %s618, %s616
        %s620 = smul.addr %s619, 8
        %s621 = scalar_lea.vmem %s5, %s620
      $region56: #{transformer_decoder.17} parent=47 // pred_fallthru
        _
    $region48: #{transformer_decoder.17} parent=5 // pred_fallthru
      _
  $region6: #{transformer_decoder.17} parent=0 // loop_footer
    %s16 = sadd.s32 1, %s12
  $region7: #{transformer_decoder.17} parent=0 // loop_footer_branch
    %11 = sbr.rel target = $region3
  $region8: #{transformer_decoder.17} parent=0 // loop_exit
    _

// kernel: transformer_decoder.19
$region0: #{transformer_decoder.19}
  #allocation0 [shape = 'u32[]', space=smem, size = 0x4, offset = 0x4, fixed_abs, tag = 'smem constant byte address 0x4 - core index']
  #allocation1 [shape = 'u32[72,128]{1,0:T(1,128)}', space=vmem, size = 0x9000, scoped, tag = 'internal scratch']
  #allocation2 [shape = 'f32[16,256]{1,0:T(8,128)}', space=vmem, size = 0x4000, scoped, tag = 'scratch operand']
  %s0 = inlined_call_operand.vmem [shape: f32[16,128], index: 0, kind: input, shape index: {}]
  %s1 = inlined_call_operand.hbm [shape: bf16[128,256], index: 1, kind: input, shape index: {}]
  %s2 = inlined_call_operand.vmem [shape: f32[1,256], index: 2, kind: input, shape index: {}]
  %s3 = inlined_call_operand.vmem [shape: f32[16,256], index: 3, kind: output, shape index: {}]
  %s4 = sld [smem:[#allocation0]]
  $region34: #{transformer_decoder.19} parent=0
    _
  %s6 = ssub.s32 1, %s4
  %s7 = scalar_select 0, %s6, %s4
  $region1: #{transformer_decoder.19} parent=0
    #allocation3 [shape = 'u8[65536]{0}', space=vmem, size = 0x10000, scoped, tag = 'input window, operand 1, single buffered']
    #allocation4 [shape = 's32[1]{0}', space=sflag, size = 0x4, scoped, tag = 'scoped memory for transformer_decoder.19']
    %8 = vsyncpa [#allocation4], 0
    // Predicated region
    $region2: #{transformer_decoder.19} parent=1 // pred_check
      _
    $region3: #{transformer_decoder.19} parent=1 // pred_check_branch
      %10 = sbr.rel (0) target = $region5
    $region4: #{transformer_decoder.19} parent=1 // pred_region
      _
    $region5: #{transformer_decoder.19} parent=1 // pred_fallthru
      _
    // Predicated region
    $region6: #{transformer_decoder.19} parent=1 // pred_check
      _
    $region7: #{transformer_decoder.19} parent=1 // pred_check_branch
      %12 = sbr.rel (0) target = $region9
    $region8: #{transformer_decoder.19} parent=1 // pred_region
      %14 = vsyncadd [#allocation4], 0
      %s15 = sshll.u32 %s1, 4
      %s16 = int_to_ptr.hbm [resolvable:$true] %s15
      %s17 = sshll.u32 [#allocation3], 4
      %s18 = int_to_ptr.vmem [resolvable:$true] %s17
      %23 = dma.hbm_to_vmem [thread:$0]  %s16, 2048, %s18, [#allocation4], 128, 128, 8
    $region9: #{transformer_decoder.19} parent=1 // pred_fallthru
      _
    // Predicated region
    $region10: #{transformer_decoder.19} parent=1 // pred_check
      _
    $region11: #{transformer_decoder.19} parent=1 // pred_check_branch
      %25 = sbr.rel (0) target = $region13
    $region12: #{transformer_decoder.19} parent=1 // pred_region
      _
    $region13: #{transformer_decoder.19} parent=1 // pred_fallthru
      _
    // Predicated region
    $region14: #{transformer_decoder.19} parent=1 // pred_check
      _
    $region15: #{transformer_decoder.19} parent=1 // pred_check_branch
      %27 = sbr.rel (0) target = $region17
    $region16: #{transformer_decoder.19} parent=1 // pred_region
      %29 = dma.done [#allocation4], 2048
    $region17: #{transformer_decoder.19} parent=1 // pred_fallthru
      _
    %p30 = scmp.eq.s32.totalorder 0, 0
    // Predicated region
    $region18: #{transformer_decoder.19} parent=1 // pred_check
      %p31 = pneg %p30
    $region19: #{transformer_decoder.19} parent=1 // pred_check_branch
      %33 = sbr.rel (%p31) target = $region21
    $region20: #{transformer_decoder.19} parent=1 // pred_region
      %34 = vst [vmem:[#allocation2] sm:$0xff] 0.0
      %35 = vst [vmem:[#allocation2 + $0x8] sm:$0xff] 0.0
      %36 = vst [vmem:[#allocation2 + $0x10] sm:$0xff] 0.0
      %37 = vst [vmem:[#allocation2 + $0x18] sm:$0xff] 0.0
    $region21: #{transformer_decoder.19} parent=1 // pred_fallthru
      _
    %v38 = vld [vmem:[#allocation2] sm:$0xff]
    %v39 = vld [vmem:[#allocation2 + $0x8] sm:$0xff]
    %v40 = vld [vmem:[#allocation2 + $0x10] sm:$0xff]
    %v41 = vld [vmem:[#allocation2 + $0x18] sm:$0xff]
    %v42 = vld [vmem:[%s0] sm:$0xff]
    %v43 = vld [vmem:[%s0 + $0x8] sm:$0xff]
    %v44 = vpack.c.bf16 %v43, %v42
    %v45 = vld [vmem:[#allocation3] sm:$0xff]
    %v46 = vld [vmem:[#allocation3 + $0x8] sm:$0xff]
    %v47 = vld [vmem:[#allocation3 + $0x10] sm:$0xff]
    %v48 = vld [vmem:[#allocation3 + $0x18] sm:$0xff]
    %v49 = vld [vmem:[#allocation3 + $0x20] sm:$0xff]
    %v50 = vld [vmem:[#allocation3 + $0x28] sm:$0xff]
    %v51 = vld [vmem:[#allocation3 + $0x30] sm:$0xff]
    %v52 = vld [vmem:[#allocation3 + $0x38] sm:$0xff]
    %v53 = vld [vmem:[#allocation3 + $0x40] sm:$0xff]
    %v54 = vld [vmem:[#allocation3 + $0x48] sm:$0xff]
    %v55 = vld [vmem:[#allocation3 + $0x50] sm:$0xff]
    %v56 = vld [vmem:[#allocation3 + $0x58] sm:$0xff]
    %v57 = vld [vmem:[#allocation3 + $0x60] sm:$0xff]
    %v58 = vld [vmem:[#allocation3 + $0x68] sm:$0xff]
    %v59 = vld [vmem:[#allocation3 + $0x70] sm:$0xff]
    %v60 = vld [vmem:[#allocation3 + $0x78] sm:$0xff]
    %v77 = vunpack.c.l.b16 %v45
    %v78 = vunpack.c.h.b16 %v45
    %v79 = vunpack.c.l.b16 %v46
    %v80 = vunpack.c.h.b16 %v46
    %v81 = vunpack.c.l.b16 %v47
    %v82 = vunpack.c.h.b16 %v47
    %v83 = vunpack.c.l.b16 %v48
    %v84 = vunpack.c.h.b16 %v48
    %v85 = vunpack.c.l.b16 %v49
    %v86 = vunpack.c.h.b16 %v49
    %v87 = vunpack.c.l.b16 %v50
    %v88 = vunpack.c.h.b16 %v50
    %v89 = vunpack.c.l.b16 %v51
    %v90 = vunpack.c.h.b16 %v51
    %v91 = vunpack.c.l.b16 %v52
    %v92 = vunpack.c.h.b16 %v52
    %v93 = vunpack.c.l.b16 %v53
    %v94 = vunpack.c.h.b16 %v53
    %v95 = vunpack.c.l.b16 %v54
    %v96 = vunpack.c.h.b16 %v54
    %v97 = vunpack.c.l.b16 %v55
    %v98 = vunpack.c.h.b16 %v55
    %v99 = vunpack.c.l.b16 %v56
    %v100 = vunpack.c.h.b16 %v56
    %v101 = vunpack.c.l.b16 %v57
    %v102 = vunpack.c.h.b16 %v57
    %v103 = vunpack.c.l.b16 %v58
    %v104 = vunpack.c.h.b16 %v58
    %v105 = vunpack.c.l.b16 %v59
    %v106 = vunpack.c.h.b16 %v59
    %v107 = vunpack.c.l.b16 %v60
    %v108 = vunpack.c.h.b16 %v60
    %v109 = vpack.c.b16 %v79, %v77
    %v110 = vpack.c.b16 %v80, %v78
    %v111 = vpack.c.b16 %v83, %v81
    %v112 = vpack.c.b16 %v84, %v82
    %v113 = vpack.c.b16 %v87, %v85
    %v114 = vpack.c.b16 %v88, %v86
    %v115 = vpack.c.b16 %v91, %v89
    %v116 = vpack.c.b16 %v92, %v90
    %v117 = vpack.c.b16 %v95, %v93
    %v118 = vpack.c.b16 %v96, %v94
    %v119 = vpack.c.b16 %v99, %v97
    %v120 = vpack.c.b16 %v100, %v98
    %v121 = vpack.c.b16 %v103, %v101
    %v122 = vpack.c.b16 %v104, %v102
    %v123 = vpack.c.b16 %v107, %v105
    %v124 = vpack.c.b16 %v108, %v106
    %141 = vmatpush.bf16.msra.mxu0 %v123
    %142 = vmatpush.bf16.msra.mxu0 %v121
    %143 = vmatpush.bf16.msra.mxu0 %v119
    %144 = vmatpush.bf16.msra.mxu0 %v117
    %145 = vmatpush.bf16.msra.mxu0 %v115
    %146 = vmatpush.bf16.msra.mxu0 %v113
    %147 = vmatpush.bf16.msra.mxu0 %v111
    %148 = vmatpush.bf16.msra.mxu0 %v109
    %149 = vmatmul.bf16.gmra.mxu0 %v44
    %v150 = vpop.f32.mrf.mxu0
    %v151 = vadd.f32 0.0, %v150
    %v152 = vpop.f32.mrf.mxu0
    %v153 = vadd.f32 0.0, %v152
    %154 = vdwg.mxu0
    %155 = vmatpush.bf16.msra.mxu0 %v124
    %156 = vmatpush.bf16.msra.mxu0 %v122
    %157 = vmatpush.bf16.msra.mxu0 %v120
    %158 = vmatpush.bf16.msra.mxu0 %v118
    %159 = vmatpush.bf16.msra.mxu0 %v116
    %160 = vmatpush.bf16.msra.mxu0 %v114
    %161 = vmatpush.bf16.msra.mxu0 %v112
    %162 = vmatpush.bf16.msra.mxu0 %v110
    %163 = vmatmul.bf16.gmra.mxu0 %v44
    %v164 = vpop.f32.mrf.mxu0
    %v165 = vadd.f32 0.0, %v164
    %v166 = vpop.f32.mrf.mxu0
    %v167 = vadd.f32 0.0, %v166
    %168 = vdwg.mxu0
    %v169 = vadd.f32 %v38, %v151
    %v170 = vadd.f32 %v39, %v165
    %v171 = vadd.f32 %v40, %v153
    %v172 = vadd.f32 %v41, %v167
    %173 = vst [vmem:[#allocation2] sm:$0xff] %v169
    %174 = vst [vmem:[#allocation2 + $0x8] sm:$0xff] %v170
    %175 = vst [vmem:[#allocation2 + $0x10] sm:$0xff] %v171
    %176 = vst [vmem:[#allocation2 + $0x18] sm:$0xff] %v172
    // Predicated region
    $region22: #{transformer_decoder.19} parent=1 // pred_check
      %p177 = pneg %p30
    $region23: #{transformer_decoder.19} parent=1 // pred_check_branch
      %179 = sbr.rel (%p177) target = $region25
    $region24: #{transformer_decoder.19} parent=1 // pred_region
      %v180 = vld [vmem:[#allocation2] sm:$0xff]
      %v181 = vld [vmem:[#allocation2 + $0x8] sm:$0xff]
      %v182 = vld [vmem:[#allocation2 + $0x10] sm:$0xff]
      %v183 = vld [vmem:[#allocation2 + $0x18] sm:$0xff]
      %v184 = vld [vmem:[%s2] sm:$0x3]
      %v186 = vperm.slane %v184, 0
      %v187 = vperm.slane %v184, 1
      %v190 = vadd.f32 %v180, %v186
      %v191 = vadd.f32 %v181, %v187
      %v192 = vadd.f32 %v182, %v186
      %v193 = vadd.f32 %v183, %v187
      %v194 = vmax.f32 %v190, 0.0
      %v195 = vmax.f32 %v191, 0.0
      %v196 = vmax.f32 %v192, 0.0
      %v197 = vmax.f32 %v193, 0.0
      %198 = vst [vmem:[%s3] sm:$0xff] %v194
      %199 = vst [vmem:[%s3 + $0x8] sm:$0xff] %v195
      %200 = vst [vmem:[%s3 + $0x10] sm:$0xff] %v196
      %201 = vst [vmem:[%s3 + $0x18] sm:$0xff] %v197
    $region25: #{transformer_decoder.19} parent=1 // pred_fallthru
      _
    // Predicated region
    $region26: #{transformer_decoder.19} parent=1 // pred_check
      _
    $region27: #{transformer_decoder.19} parent=1 // pred_check_branch
      %203 = sbr.rel (0) target = $region29
    $region28: #{transformer_decoder.19} parent=1 // pred_region
      _
    $region29: #{transformer_decoder.19} parent=1 // pred_fallthru
      _
    // Predicated region
    $region30: #{transformer_decoder.19} parent=1 // pred_check
      _
    $region31: #{transformer_decoder.19} parent=1 // pred_check_branch
      %205 = sbr.rel (0) target = $region33
    $region32: #{transformer_decoder.19} parent=1 // pred_region
      _
    $region33: #{transformer_decoder.19} parent=1 // pred_fallthru
      _
    %206 = vsyncpa [#allocation4], 1

// kernel: transformer_decoder.18
$region0: #{transformer_decoder.18}
  #allocation0 [shape = 'u32[]', space=smem, size = 0x4, offset = 0x4, fixed_abs, tag = 'smem constant byte address 0x4 - core index']
  #allocation1 [shape = 'u32[72,128]{1,0:T(1,128)}', space=vmem, size = 0x9000, scoped, tag = 'internal scratch']
  #allocation2 [shape = 'f32[16,128]{1,0:T(8,128)}', space=vmem, size = 0x2000, scoped, tag = 'scratch operand']
  %s0 = inlined_call_operand.vmem [shape: f32[16,128], index: 0, kind: input, shape index: {}]
  %s1 = inlined_call_operand.hbm [shape: bf16[128,128], index: 1, kind: input, shape index: {}]
  %s2 = inlined_call_operand.vmem [shape: f32[1,128], index: 2, kind: input, shape index: {}]
  %s3 = inlined_call_operand.vmem [shape: f32[16,128], index: 3, kind: input, shape index: {}]
  %s4 = inlined_call_operand.vmem [shape: f32[1,128], index: 4, kind: input, shape index: {}]
  %s5 = inlined_call_operand.vmem [shape: f32[1,128], index: 5, kind: input, shape index: {}]
  %s6 = inlined_call_operand.vmem [shape: f32[16,128], index: 6, kind: output, shape index: {}]
  %s7 = sld [smem:[#allocation0]]
  $region46: #{transformer_decoder.18} parent=0
    _
  %s9 = ssub.s32 1, %s7
  %s10 = scalar_select 0, %s9, %s7
  $region1: #{transformer_decoder.18} parent=0
    #allocation3 [shape = 'u8[32768]{0}', space=vmem, size = 0x8000, scoped, tag = 'input window, operand 1, single buffered']
    #allocation4 [shape = 's32[1]{0}', space=sflag, size = 0x4, scoped, tag = 'scoped memory for transformer_decoder.18']
    %11 = vsyncpa [#allocation4], 0
    // Predicated region
    $region2: #{transformer_decoder.18} parent=1 // pred_check
      _
    $region3: #{transformer_decoder.18} parent=1 // pred_check_branch
      %13 = sbr.rel (0) target = $region5
    $region4: #{transformer_decoder.18} parent=1 // pred_region
      _
    $region5: #{transformer_decoder.18} parent=1 // pred_fallthru
      _
    // Predicated region
    $region6: #{transformer_decoder.18} parent=1 // pred_check
      _
    $region7: #{transformer_decoder.18} parent=1 // pred_check_branch
      %15 = sbr.rel (0) target = $region9
    $region8: #{transformer_decoder.18} parent=1 // pred_region
      %17 = vsyncadd [#allocation4], 0
      %s18 = sshll.u32 %s1, 4
      %s19 = int_to_ptr.hbm [resolvable:$true] %s18
      %s20 = sshll.u32 [#allocation3], 4
      %s21 = int_to_ptr.vmem [resolvable:$true] %s20
      %26 = dma.hbm_to_vmem [thread:$0]  %s19, 1024, %s21, [#allocation4], 64, 64, 4
    $region9: #{transformer_decoder.18} parent=1 // pred_fallthru
      _
    // Predicated region
    $region10: #{transformer_decoder.18} parent=1 // pred_check
      _
    $region11: #{transformer_decoder.18} parent=1 // pred_check_branch
      %28 = sbr.rel (0) target = $region13
    $region12: #{transformer_decoder.18} parent=1 // pred_region
      _
    $region13: #{transformer_decoder.18} parent=1 // pred_fallthru
      _
    // Predicated region
    $region14: #{transformer_decoder.18} parent=1 // pred_check
      _
    $region15: #{transformer_decoder.18} parent=1 // pred_check_branch
      %30 = sbr.rel (0) target = $region17
    $region16: #{transformer_decoder.18} parent=1 // pred_region
      _
    $region17: #{transformer_decoder.18} parent=1 // pred_fallthru
      _
    // Predicated region
    $region18: #{transformer_decoder.18} parent=1 // pred_check
      _
    $region19: #{transformer_decoder.18} parent=1 // pred_check_branch
      %32 = sbr.rel (0) target = $region21
    $region20: #{transformer_decoder.18} parent=1 // pred_region
      _
    $region21: #{transformer_decoder.18} parent=1 // pred_fallthru
      _
    // Predicated region
    $region22: #{transformer_decoder.18} parent=1 // pred_check
      _
    $region23: #{transformer_decoder.18} parent=1 // pred_check_branch
      %34 = sbr.rel (0) target = $region25
    $region24: #{transformer_decoder.18} parent=1 // pred_region
      _
    $region25: #{transformer_decoder.18} parent=1 // pred_fallthru
      _
    // Predicated region
    $region26: #{transformer_decoder.18} parent=1 // pred_check
      _
    $region27: #{transformer_decoder.18} parent=1 // pred_check_branch
      %36 = sbr.rel (0) target = $region29
    $region28: #{transformer_decoder.18} parent=1 // pred_region
      %38 = dma.done [#allocation4], 1024
    $region29: #{transformer_decoder.18} parent=1 // pred_fallthru
      _
    %p39 = scmp.eq.s32.totalorder 0, 0
    // Predicated region
    $region30: #{transformer_decoder.18} parent=1 // pred_check
      %p40 = pneg %p39
    $region31: #{transformer_decoder.18} parent=1 // pred_check_branch
      %42 = sbr.rel (%p40) target = $region33
    $region32: #{transformer_decoder.18} parent=1 // pred_region
      %43 = vst [vmem:[#allocation2] sm:$0xff] 0.0
      %44 = vst [vmem:[#allocation2 + $0x8] sm:$0xff] 0.0
    $region33: #{transformer_decoder.18} parent=1 // pred_fallthru
      _
    %v45 = vld [vmem:[#allocation2] sm:$0xff]
    %v46 = vld [vmem:[#allocation2 + $0x8] sm:$0xff]
    %v47 = vld [vmem:[%s0] sm:$0xff]
    %v48 = vld [vmem:[%s0 + $0x8] sm:$0xff]
    %v49 = vpack.c.bf16 %v48, %v47
    %v50 = vld [vmem:[#allocation3] sm:$0xf]
    %v51 = vld [vmem:[#allocation3 + $0x4] sm:$0xf]
    %v52 = vld [vmem:[#allocation3 + $0x8] sm:$0xf]
    %v53 = vld [vmem:[#allocation3 + $0xc] sm:$0xf]
    %v54 = vld [vmem:[#allocation3 + $0x10] sm:$0xf]
    %v55 = vld [vmem:[#allocation3 + $0x14] sm:$0xf]
    %v56 = vld [vmem:[#allocation3 + $0x18] sm:$0xf]
    %v57 = vld [vmem:[#allocation3 + $0x1c] sm:$0xf]
    %v58 = vld [vmem:[#allocation3 + $0x20] sm:$0xf]
    %v59 = vld [vmem:[#allocation3 + $0x24] sm:$0xf]
    %v60 = vld [vmem:[#allocation3 + $0x28] sm:$0xf]
    %v61 = vld [vmem:[#allocation3 + $0x2c] sm:$0xf]
    %v62 = vld [vmem:[#allocation3 + $0x30] sm:$0xf]
    %v63 = vld [vmem:[#allocation3 + $0x34] sm:$0xf]
    %v64 = vld [vmem:[#allocation3 + $0x38] sm:$0xf]
    %v65 = vld [vmem:[#allocation3 + $0x3c] sm:$0xf]
    %v82 = vunpack.c.l.b16 %v50
    %v83 = vunpack.c.l.b16 %v51
    %v84 = vunpack.c.l.b16 %v52
    %v85 = vunpack.c.l.b16 %v53
    %v86 = vunpack.c.l.b16 %v54
    %v87 = vunpack.c.l.b16 %v55
    %v88 = vunpack.c.l.b16 %v56
    %v89 = vunpack.c.l.b16 %v57
    %v90 = vunpack.c.l.b16 %v58
    %v91 = vunpack.c.l.b16 %v59
    %v92 = vunpack.c.l.b16 %v60
    %v93 = vunpack.c.l.b16 %v61
    %v94 = vunpack.c.l.b16 %v62
    %v95 = vunpack.c.l.b16 %v63
    %v96 = vunpack.c.l.b16 %v64
    %v97 = vunpack.c.l.b16 %v65
    %v98 = vpack.c.b16 %v83, %v82
    %v99 = vpack.c.b16 %v85, %v84
    %v100 = vpack.c.b16 %v87, %v86
    %v101 = vpack.c.b16 %v89, %v88
    %v102 = vpack.c.b16 %v91, %v90
    %v103 = vpack.c.b16 %v93, %v92
    %v104 = vpack.c.b16 %v95, %v94
    %v105 = vpack.c.b16 %v97, %v96
    %114 = vmatpush.bf16.msra.mxu0 %v105
    %115 = vmatpush.bf16.msra.mxu0 %v104
    %116 = vmatpush.bf16.msra.mxu0 %v103
    %117 = vmatpush.bf16.msra.mxu0 %v102
    %118 = vmatpush.bf16.msra.mxu0 %v101
    %119 = vmatpush.bf16.msra.mxu0 %v100
    %120 = vmatpush.bf16.msra.mxu0 %v99
    %121 = vmatpush.bf16.msra.mxu0 %v98
    %122 = vmatmul.bf16.gmra.mxu0 %v49
    %v123 = vpop.f32.mrf.mxu0
    %v124 = vadd.f32 0.0, %v123
    %v125 = vpop.f32.mrf.mxu0
    %v126 = vadd.f32 0.0, %v125
    %127 = vdwg.mxu0
    %v128 = vadd.f32 %v45, %v124
    %v129 = vadd.f32 %v46, %v126
    %130 = vst [vmem:[#allocation2] sm:$0xff] %v128
    %131 = vst [vmem:[#allocation2 + $0x8] sm:$0xff] %v129
    // Predicated region
    $region34: #{transformer_decoder.18} parent=1 // pred_check
      %p132 = pneg %p39
    $region35: #{transformer_decoder.18} parent=1 // pred_check_branch
      %134 = sbr.rel (%p132) target = $region37
    $region36: #{transformer_decoder.18} parent=1 // pred_region
      %v135 = vld [vmem:[#allocation2] sm:$0xff]
      %v136 = vld [vmem:[#allocation2 + $0x8] sm:$0xff]
      %v137 = vld [vmem:[%s2] sm:$0x1]
      %v139 = vperm.slane %v137, 0
      %v141 = vadd.f32 %v135, %v139
      %v142 = vadd.f32 %v136, %v139
      %v143 = vld [vmem:[%s3] sm:$0xff]
      %v144 = vld [vmem:[%s3 + $0x8] sm:$0xff]
      %v145 = vadd.f32 %v141, %v143
      %v146 = vadd.f32 %v142, %v144
      %147 = vadd.xlane.f32.xlu0 %v145
      %v148 = vpop.xlane.xlu0 %147
      %149 = vadd.xlane.f32.xlu0 %v146
      %v150 = vpop.xlane.xlu0 %149
      %v151 = vrcp.pop 128.0
      %v152 = vmul.f32 128.0, %v151
      %v153 = vsub.f32 1.0, %v152
      %v154 = vmul.f32 %v151, %v153
      %v155 = vadd.f32 %v151, %v154
      %vm156 = vweird.f32 %v151
      %v157 = vsel %vm156, %v151, %v155
      %v158 = vmul.f32 %v148, %v157
      %v159 = vmul.f32 %v150, %v157
      %v160 = vsub.f32 %v145, %v158
      %v161 = vsub.f32 %v146, %v159
      %v162 = vmul.f32 %v160, %v160
      %v163 = vmul.f32 %v161, %v161
      %164 = vadd.xlane.f32.xlu0 %v162
      %v165 = vpop.xlane.xlu0 %164
      %166 = vadd.xlane.f32.xlu0 %v163
      %v167 = vpop.xlane.xlu0 %166
      %v168 = vmul.f32 %v165, %v157
      %v169 = vmul.f32 %v167, %v157
      %v170 = vadd.f32 %v168, 1e-05
      %v171 = vadd.f32 %v169, 1e-05
      %v172 = vrsqrt.pop %v170
      %v173 = vmul.f32 %v172, %v170
      %v174 = vmul.f32 %v173, %v172
      %v175 = vmul.f32 0.5, %v174
      %v176 = vsub.f32 1.5, %v175
      %v177 = vmul.f32 %v172, %v176
      %vm178 = vweird.f32 %v170
      %vm179 = vweird.f32 %v172
      %vm180 = vmor %vm178, %vm179
      %v181 = vsel %vm180, %v172, %v177
      %v182 = vrsqrt.pop %v171
      %v183 = vmul.f32 %v182, %v171
      %v184 = vmul.f32 %v183, %v182
      %v185 = vmul.f32 0.5, %v184
      %v186 = vsub.f32 1.5, %v185
      %v187 = vmul.f32 %v182, %v186
      %vm188 = vweird.f32 %v171
      %vm189 = vweird.f32 %v182
      %vm190 = vmor %vm188, %vm189
      %v191 = vsel %vm190, %v182, %v187
      %v192 = vmul.f32 %v160, %v181
      %v193 = vmul.f32 %v161, %v191
      %v194 = vld [vmem:[%s4] sm:$0x1]
      %v196 = vperm.slane %v194, 0
      %v198 = vmul.f32 %v192, %v196
      %v199 = vmul.f32 %v193, %v196
      %v200 = vld [vmem:[%s5] sm:$0x1]
      %v202 = vperm.slane %v200, 0
      %v204 = vadd.f32 %v198, %v202
      %v205 = vadd.f32 %v199, %v202
      %206 = vst [vmem:[%s6] sm:$0xff] %v204
      %207 = vst [vmem:[%s6 + $0x8] sm:$0xff] %v205
    $region37: #{transformer_decoder.18} parent=1 // pred_fallthru
      _
    // Predicated region
    $region38: #{transformer_decoder.18} parent=1 // pred_check
      _
    $region39: #{transformer_decoder.18} parent=1 // pred_check_branch
      %209 = sbr.rel (0) target = $region41
    $region40: #{transformer_decoder.18} parent=1 // pred_region
      _
    $region41: #{transformer_decoder.18} parent=1 // pred_fallthru
      _
    // Predicated region
    $region42: #{transformer_decoder.18} parent=1 // pred_check
      _
    $region43: #{transformer_decoder.18} parent=1 // pred_check_branch
      %211 = sbr.rel (0) target = $region45
    $region44: #{transformer_decoder.18} parent=1 // pred_region
      _
    $region45: #{transformer_decoder.18} parent=1 // pred_fallthru
      _
    %212 = vsyncpa [#allocation4], 1

// kernel: transformer_decoder.26
$region0: #{transformer_decoder.26}
  #allocation0 [shape = 'u32[]', space=smem, size = 0x4, offset = 0x4, fixed_abs, tag = 'smem constant byte address 0x4 - core index']
  #allocation1 [shape = 'u32[72,128]{1,0:T(1,128)}', space=vmem, size = 0x9000, scoped, tag = 'internal scratch']
  #allocation2 [shape = 'f32[16,256]{1,0:T(8,128)}', space=vmem, size = 0x4000, scoped, tag = 'scratch operand']
  %s0 = inlined_call_operand.vmem [shape: f32[16,128], index: 0, kind: input, shape index: {}]
  %s1 = inlined_call_operand.vmem [shape: bf16[128,256], index: 1, kind: input, shape index: {}]
  %s2 = inlined_call_operand.vmem [shape: f32[1,256], index: 2, kind: input, shape index: {}]
  %s3 = inlined_call_operand.vmem [shape: f32[16,256], index: 3, kind: output, shape index: {}]
  %s4 = sld [smem:[#allocation0]]
  $region30: #{transformer_decoder.26} parent=0
    _
  %s6 = ssub.s32 1, %s4
  %s7 = scalar_select 0, %s6, %s4
  // Predicated region
  $region2: #{transformer_decoder.26} parent=0 // pred_check
    _
  $region3: #{transformer_decoder.26} parent=0 // pred_check_branch
    %9 = sbr.rel (0) target = $region5
  $region4: #{transformer_decoder.26} parent=0 // pred_region
    _
  $region5: #{transformer_decoder.26} parent=0 // pred_fallthru
    _
  // Predicated region
  $region6: #{transformer_decoder.26} parent=0 // pred_check
    _
  $region7: #{transformer_decoder.26} parent=0 // pred_check_branch
    %11 = sbr.rel (0) target = $region9
  $region8: #{transformer_decoder.26} parent=0 // pred_region
    _
  $region9: #{transformer_decoder.26} parent=0 // pred_fallthru
    _
  // Predicated region
  $region10: #{transformer_decoder.26} parent=0 // pred_check
    _
  $region11: #{transformer_decoder.26} parent=0 // pred_check_branch
    %13 = sbr.rel (0) target = $region13
  $region12: #{transformer_decoder.26} parent=0 // pred_region
    _
  $region13: #{transformer_decoder.26} parent=0 // pred_fallthru
    _
  %p14 = scmp.eq.s32.totalorder 0, 0
  // Predicated region
  $region14: #{transformer_decoder.26} parent=0 // pred_check
    %p15 = pneg %p14
  $region15: #{transformer_decoder.26} parent=0 // pred_check_branch
    %17 = sbr.rel (%p15) target = $region17
  $region16: #{transformer_decoder.26} parent=0 // pred_region
    %18 = vst [vmem:[#allocation2] sm:$0xff] 0.0
    %19 = vst [vmem:[#allocation2 + $0x8] sm:$0xff] 0.0
    %20 = vst [vmem:[#allocation2 + $0x10] sm:$0xff] 0.0
    %21 = vst [vmem:[#allocation2 + $0x18] sm:$0xff] 0.0
  $region17: #{transformer_decoder.26} parent=0 // pred_fallthru
    _
  %v22 = vld [vmem:[#allocation2] sm:$0xff]
  %v23 = vld [vmem:[#allocation2 + $0x8] sm:$0xff]
  %v24 = vld [vmem:[#allocation2 + $0x10] sm:$0xff]
  %v25 = vld [vmem:[#allocation2 + $0x18] sm:$0xff]
  %v26 = vld [vmem:[%s0] sm:$0xff]
  %v27 = vld [vmem:[%s0 + $0x8] sm:$0xff]
  %v28 = vpack.c.bf16 %v27, %v26
  %v29 = vld [vmem:[%s1] sm:$0xff]
  %v30 = vld [vmem:[%s1 + $0x8] sm:$0xff]
  %v31 = vld [vmem:[%s1 + $0x10] sm:$0xff]
  %v32 = vld [vmem:[%s1 + $0x18] sm:$0xff]
  %v33 = vld [vmem:[%s1 + $0x20] sm:$0xff]
  %v34 = vld [vmem:[%s1 + $0x28] sm:$0xff]
  %v35 = vld [vmem:[%s1 + $0x30] sm:$0xff]
  %v36 = vld [vmem:[%s1 + $0x38] sm:$0xff]
  %v37 = vld [vmem:[%s1 + $0x40] sm:$0xff]
  %v38 = vld [vmem:[%s1 + $0x48] sm:$0xff]
  %v39 = vld [vmem:[%s1 + $0x50] sm:$0xff]
  %v40 = vld [vmem:[%s1 + $0x58] sm:$0xff]
  %v41 = vld [vmem:[%s1 + $0x60] sm:$0xff]
  %v42 = vld [vmem:[%s1 + $0x68] sm:$0xff]
  %v43 = vld [vmem:[%s1 + $0x70] sm:$0xff]
  %v44 = vld [vmem:[%s1 + $0x78] sm:$0xff]
  %v61 = vunpack.c.l.b16 %v29
  %v62 = vunpack.c.h.b16 %v29
  %v63 = vunpack.c.l.b16 %v30
  %v64 = vunpack.c.h.b16 %v30
  %v65 = vunpack.c.l.b16 %v31
  %v66 = vunpack.c.h.b16 %v31
  %v67 = vunpack.c.l.b16 %v32
  %v68 = vunpack.c.h.b16 %v32
  %v69 = vunpack.c.l.b16 %v33
  %v70 = vunpack.c.h.b16 %v33
  %v71 = vunpack.c.l.b16 %v34
  %v72 = vunpack.c.h.b16 %v34
  %v73 = vunpack.c.l.b16 %v35
  %v74 = vunpack.c.h.b16 %v35
  %v75 = vunpack.c.l.b16 %v36
  %v76 = vunpack.c.h.b16 %v36
  %v77 = vunpack.c.l.b16 %v37
  %v78 = vunpack.c.h.b16 %v37
  %v79 = vunpack.c.l.b16 %v38
  %v80 = vunpack.c.h.b16 %v38
  %v81 = vunpack.c.l.b16 %v39
  %v82 = vunpack.c.h.b16 %v39
  %v83 = vunpack.c.l.b16 %v40
  %v84 = vunpack.c.h.b16 %v40
  %v85 = vunpack.c.l.b16 %v41
  %v86 = vunpack.c.h.b16 %v41
  %v87 = vunpack.c.l.b16 %v42
  %v88 = vunpack.c.h.b16 %v42
  %v89 = vunpack.c.l.b16 %v43
  %v90 = vunpack.c.h.b16 %v43
  %v91 = vunpack.c.l.b16 %v44
  %v92 = vunpack.c.h.b16 %v44
  %v93 = vpack.c.b16 %v63, %v61
  %v94 = vpack.c.b16 %v64, %v62
  %v95 = vpack.c.b16 %v67, %v65
  %v96 = vpack.c.b16 %v68, %v66
  %v97 = vpack.c.b16 %v71, %v69
  %v98 = vpack.c.b16 %v72, %v70
  %v99 = vpack.c.b16 %v75, %v73
  %v100 = vpack.c.b16 %v76, %v74
  %v101 = vpack.c.b16 %v79, %v77
  %v102 = vpack.c.b16 %v80, %v78
  %v103 = vpack.c.b16 %v83, %v81
  %v104 = vpack.c.b16 %v84, %v82
  %v105 = vpack.c.b16 %v87, %v85
  %v106 = vpack.c.b16 %v88, %v86
  %v107 = vpack.c.b16 %v91, %v89
  %v108 = vpack.c.b16 %v92, %v90
  %125 = vmatpush.bf16.msra.mxu0 %v107
  %126 = vmatpush.bf16.msra.mxu0 %v105
  %127 = vmatpush.bf16.msra.mxu0 %v103
  %128 = vmatpush.bf16.msra.mxu0 %v101
  %129 = vmatpush.bf16.msra.mxu0 %v99
  %130 = vmatpush.bf16.msra.mxu0 %v97
  %131 = vmatpush.bf16.msra.mxu0 %v95
  %132 = vmatpush.bf16.msra.mxu0 %v93
  %133 = vmatmul.bf16.gmra.mxu0 %v28
  %v134 = vpop.f32.mrf.mxu0
  %v135 = vadd.f32 0.0, %v134
  %v136 = vpop.f32.mrf.mxu0
  %v137 = vadd.f32 0.0, %v136
  %138 = vdwg.mxu0
  %139 = vmatpush.bf16.msra.mxu0 %v108
  %140 = vmatpush.bf16.msra.mxu0 %v106
  %141 = vmatpush.bf16.msra.mxu0 %v104
  %142 = vmatpush.bf16.msra.mxu0 %v102
  %143 = vmatpush.bf16.msra.mxu0 %v100
  %144 = vmatpush.bf16.msra.mxu0 %v98
  %145 = vmatpush.bf16.msra.mxu0 %v96
  %146 = vmatpush.bf16.msra.mxu0 %v94
  %147 = vmatmul.bf16.gmra.mxu0 %v28
  %v148 = vpop.f32.mrf.mxu0
  %v149 = vadd.f32 0.0, %v148
  %v150 = vpop.f32.mrf.mxu0
  %v151 = vadd.f32 0.0, %v150
  %152 = vdwg.mxu0
  %v153 = vadd.f32 %v22, %v135
  %v154 = vadd.f32 %v23, %v149
  %v155 = vadd.f32 %v24, %v137
  %v156 = vadd.f32 %v25, %v151
  %157 = vst [vmem:[#allocation2] sm:$0xff] %v153
  %158 = vst [vmem:[#allocation2 + $0x8] sm:$0xff] %v154
  %159 = vst [vmem:[#allocation2 + $0x10] sm:$0xff] %v155
  %160 = vst [vmem:[#allocation2 + $0x18] sm:$0xff] %v156
  // Predicated region
  $region18: #{transformer_decoder.26} parent=0 // pred_check
    %p161 = pneg %p14
  $region19: #{transformer_decoder.26} parent=0 // pred_check_branch
    %163 = sbr.rel (%p161) target = $region21
  $region20: #{transformer_decoder.26} parent=0 // pred_region
    %v164 = vld [vmem:[#allocation2] sm:$0xff]
    %v165 = vld [vmem:[#allocation2 + $0x8] sm:$0xff]
    %v166 = vld [vmem:[#allocation2 + $0x10] sm:$0xff]
    %v167 = vld [vmem:[#allocation2 + $0x18] sm:$0xff]
    %v168 = vld [vmem:[%s2] sm:$0x3]
    %v170 = vperm.slane %v168, 0
    %v171 = vperm.slane %v168, 1
    %v174 = vadd.f32 %v164, %v170
    %v175 = vadd.f32 %v165, %v171
    %v176 = vadd.f32 %v166, %v170
    %v177 = vadd.f32 %v167, %v171
    %v178 = vmax.f32 %v174, 0.0
    %v179 = vmax.f32 %v175, 0.0
    %v180 = vmax.f32 %v176, 0.0
    %v181 = vmax.f32 %v177, 0.0
    %182 = vst [vmem:[%s3] sm:$0xff] %v178
    %183 = vst [vmem:[%s3 + $0x8] sm:$0xff] %v179
    %184 = vst [vmem:[%s3 + $0x10] sm:$0xff] %v180
    %185 = vst [vmem:[%s3 + $0x18] sm:$0xff] %v181
  $region21: #{transformer_decoder.26} parent=0 // pred_fallthru
    _
  // Predicated region
  $region22: #{transformer_decoder.26} parent=0 // pred_check
    _
  $region23: #{transformer_decoder.26} parent=0 // pred_check_branch
    %187 = sbr.rel (0) target = $region25
  $region24: #{transformer_decoder.26} parent=0 // pred_region
    _
  $region25: #{transformer_decoder.26} parent=0 // pred_fallthru
    _
  // Predicated region
  $region26: #{transformer_decoder.26} parent=0 // pred_check
    _
  $region27: #{transformer_decoder.26} parent=0 // pred_check_branch
    %189 = sbr.rel (0) target = $region29
  $region28: #{transformer_decoder.26} parent=0 // pred_region
    _
  $region29: #{transformer_decoder.26} parent=0 // pred_fallthru
    _

// kernel: transformer_decoder.20
$region0: #{transformer_decoder.20}
  #allocation0 [shape = 'u32[]', space=smem, size = 0x4, offset = 0x4, fixed_abs, tag = 'smem constant byte address 0x4 - core index']
  #allocation1 [shape = 'u32[72,128]{1,0:T(1,128)}', space=vmem, size = 0x9000, scoped, tag = 'internal scratch']
  #allocation2 [shape = 'f32[16,128]{1,0:T(8,128)}', space=vmem, size = 0x2000, scoped, tag = 'scratch operand']
  %s0 = inlined_call_operand.vmem [shape: f32[16,256], index: 0, kind: input, shape index: {}]
  %s1 = inlined_call_operand.hbm [shape: bf16[256,128], index: 1, kind: input, shape index: {}]
  %s2 = inlined_call_operand.vmem [shape: f32[1,128], index: 2, kind: input, shape index: {}]
  %s3 = inlined_call_operand.vmem [shape: f32[16,128], index: 3, kind: input, shape index: {}]
  %s4 = inlined_call_operand.vmem [shape: f32[1,128], index: 4, kind: input, shape index: {}]
  %s5 = inlined_call_operand.vmem [shape: f32[1,128], index: 5, kind: input, shape index: {}]
  %s6 = inlined_call_operand.vmem [shape: f32[16,128], index: 6, kind: output, shape index: {}]
  %s7 = sld [smem:[#allocation0]]
  $region46: #{transformer_decoder.20} parent=0
    _
  %s9 = ssub.s32 1, %s7
  %s10 = scalar_select 0, %s9, %s7
  $region1: #{transformer_decoder.20} parent=0
    #allocation3 [shape = 'u8[65536]{0}', space=vmem, size = 0x10000, scoped, tag = 'input window, operand 1, single buffered']
    #allocation4 [shape = 's32[1]{0}', space=sflag, size = 0x4, scoped, tag = 'scoped memory for transformer_decoder.20']
    %11 = vsyncpa [#allocation4], 0
    // Predicated region
    $region2: #{transformer_decoder.20} parent=1 // pred_check
      _
    $region3: #{transformer_decoder.20} parent=1 // pred_check_branch
      %13 = sbr.rel (0) target = $region5
    $region4: #{transformer_decoder.20} parent=1 // pred_region
      _
    $region5: #{transformer_decoder.20} parent=1 // pred_fallthru
      _
    // Predicated region
    $region6: #{transformer_decoder.20} parent=1 // pred_check
      _
    $region7: #{transformer_decoder.20} parent=1 // pred_check_branch
      %15 = sbr.rel (0) target = $region9
    $region8: #{transformer_decoder.20} parent=1 // pred_region
      %17 = vsyncadd [#allocation4], 0
      %s18 = sshll.u32 %s1, 4
      %s19 = int_to_ptr.hbm [resolvable:$true] %s18
      %s20 = sshll.u32 [#allocation3], 4
      %s21 = int_to_ptr.vmem [resolvable:$true] %s20
      %26 = dma.hbm_to_vmem [thread:$0]  %s19, 2048, %s21, [#allocation4], 64, 64, 4
    $region9: #{transformer_decoder.20} parent=1 // pred_fallthru
      _
    // Predicated region
    $region10: #{transformer_decoder.20} parent=1 // pred_check
      _
    $region11: #{transformer_decoder.20} parent=1 // pred_check_branch
      %28 = sbr.rel (0) target = $region13
    $region12: #{transformer_decoder.20} parent=1 // pred_region
      _
    $region13: #{transformer_decoder.20} parent=1 // pred_fallthru
      _
    // Predicated region
    $region14: #{transformer_decoder.20} parent=1 // pred_check
      _
    $region15: #{transformer_decoder.20} parent=1 // pred_check_branch
      %30 = sbr.rel (0) target = $region17
    $region16: #{transformer_decoder.20} parent=1 // pred_region
      _
    $region17: #{transformer_decoder.20} parent=1 // pred_fallthru
      _
    // Predicated region
    $region18: #{transformer_decoder.20} parent=1 // pred_check
      _
    $region19: #{transformer_decoder.20} parent=1 // pred_check_branch
      %32 = sbr.rel (0) target = $region21
    $region20: #{transformer_decoder.20} parent=1 // pred_region
      _
    $region21: #{transformer_decoder.20} parent=1 // pred_fallthru
      _
    // Predicated region
    $region22: #{transformer_decoder.20} parent=1 // pred_check
      _
    $region23: #{transformer_decoder.20} parent=1 // pred_check_branch
      %34 = sbr.rel (0) target = $region25
    $region24: #{transformer_decoder.20} parent=1 // pred_region
      _
    $region25: #{transformer_decoder.20} parent=1 // pred_fallthru
      _
    // Predicated region
    $region26: #{transformer_decoder.20} parent=1 // pred_check
      _
    $region27: #{transformer_decoder.20} parent=1 // pred_check_branch
      %36 = sbr.rel (0) target = $region29
    $region28: #{transformer_decoder.20} parent=1 // pred_region
      %38 = dma.done [#allocation4], 2048
    $region29: #{transformer_decoder.20} parent=1 // pred_fallthru
      _
    %p39 = scmp.eq.s32.totalorder 0, 0
    // Predicated region
    $region30: #{transformer_decoder.20} parent=1 // pred_check
      %p40 = pneg %p39
    $region31: #{transformer_decoder.20} parent=1 // pred_check_branch
      %42 = sbr.rel (%p40) target = $region33
    $region32: #{transformer_decoder.20} parent=1 // pred_region
      %43 = vst [vmem:[#allocation2] sm:$0xff] 0.0
      %44 = vst [vmem:[#allocation2 + $0x8] sm:$0xff] 0.0
    $region33: #{transformer_decoder.20} parent=1 // pred_fallthru
      _
    %v45 = vld [vmem:[#allocation2] sm:$0xff]
    %v46 = vld [vmem:[#allocation2 + $0x8] sm:$0xff]
    %v47 = vld [vmem:[%s0] sm:$0xff]
    %v48 = vld [vmem:[%s0 + $0x8] sm:$0xff]
    %v49 = vld [vmem:[%s0 + $0x10] sm:$0xff]
    %v50 = vld [vmem:[%s0 + $0x18] sm:$0xff]
    %v51 = vpack.c.bf16 %v49, %v47
    %v52 = vpack.c.bf16 %v50, %v48
    %v53 = vld [vmem:[#allocation3] sm:$0xf]
    %v54 = vld [vmem:[#allocation3 + $0x4] sm:$0xf]
    %v55 = vld [vmem:[#allocation3 + $0x8] sm:$0xf]
    %v56 = vld [vmem:[#allocation3 + $0xc] sm:$0xf]
    %v57 = vld [vmem:[#allocation3 + $0x10] sm:$0xf]
    %v58 = vld [vmem:[#allocation3 + $0x14] sm:$0xf]
    %v59 = vld [vmem:[#allocation3 + $0x18] sm:$0xf]
    %v60 = vld [vmem:[#allocation3 + $0x1c] sm:$0xf]
    %v61 = vld [vmem:[#allocation3 + $0x20] sm:$0xf]
    %v62 = vld [vmem:[#allocation3 + $0x24] sm:$0xf]
    %v63 = vld [vmem:[#allocation3 + $0x28] sm:$0xf]
    %v64 = vld [vmem:[#allocation3 + $0x2c] sm:$0xf]
    %v65 = vld [vmem:[#allocation3 + $0x30] sm:$0xf]
    %v66 = vld [vmem:[#allocation3 + $0x34] sm:$0xf]
    %v67 = vld [vmem:[#allocation3 + $0x38] sm:$0xf]
    %v68 = vld [vmem:[#allocation3 + $0x3c] sm:$0xf]
    %v69 = vld [vmem:[#allocation3 + $0x40] sm:$0xf]
    %v70 = vld [vmem:[#allocation3 + $0x44] sm:$0xf]
    %v71 = vld [vmem:[#allocation3 + $0x48] sm:$0xf]
    %v72 = vld [vmem:[#allocation3 + $0x4c] sm:$0xf]
    %v73 = vld [vmem:[#allocation3 + $0x50] sm:$0xf]
    %v74 = vld [vmem:[#allocation3 + $0x54] sm:$0xf]
    %v75 = vld [vmem:[#allocation3 + $0x58] sm:$0xf]
    %v76 = vld [vmem:[#allocation3 + $0x5c] sm:$0xf]
    %v77 = vld [vmem:[#allocation3 + $0x60] sm:$0xf]
    %v78 = vld [vmem:[#allocation3 + $0x64] sm:$0xf]
    %v79 = vld [vmem:[#allocation3 + $0x68] sm:$0xf]
    %v80 = vld [vmem:[#allocation3 + $0x6c] sm:$0xf]
    %v81 = vld [vmem:[#allocation3 + $0x70] sm:$0xf]
    %v82 = vld [vmem:[#allocation3 + $0x74] sm:$0xf]
    %v83 = vld [vmem:[#allocation3 + $0x78] sm:$0xf]
    %v84 = vld [vmem:[#allocation3 + $0x7c] sm:$0xf]
    %v117 = vunpack.c.l.b16 %v53
    %v118 = vunpack.c.l.b16 %v54
    %v119 = vunpack.c.l.b16 %v55
    %v120 = vunpack.c.l.b16 %v56
    %v121 = vunpack.c.l.b16 %v57
    %v122 = vunpack.c.l.b16 %v58
    %v123 = vunpack.c.l.b16 %v59
    %v124 = vunpack.c.l.b16 %v60
    %v125 = vunpack.c.l.b16 %v61
    %v126 = vunpack.c.l.b16 %v62
    %v127 = vunpack.c.l.b16 %v63
    %v128 = vunpack.c.l.b16 %v64
    %v129 = vunpack.c.l.b16 %v65
    %v130 = vunpack.c.l.b16 %v66
    %v131 = vunpack.c.l.b16 %v67
    %v132 = vunpack.c.l.b16 %v68
    %v133 = vunpack.c.l.b16 %v69
    %v134 = vunpack.c.l.b16 %v70
    %v135 = vunpack.c.l.b16 %v71
    %v136 = vunpack.c.l.b16 %v72
    %v137 = vunpack.c.l.b16 %v73
    %v138 = vunpack.c.l.b16 %v74
    %v139 = vunpack.c.l.b16 %v75
    %v140 = vunpack.c.l.b16 %v76
    %v141 = vunpack.c.l.b16 %v77
    %v142 = vunpack.c.l.b16 %v78
    %v143 = vunpack.c.l.b16 %v79
    %v144 = vunpack.c.l.b16 %v80
    %v145 = vunpack.c.l.b16 %v81
    %v146 = vunpack.c.l.b16 %v82
    %v147 = vunpack.c.l.b16 %v83
    %v148 = vunpack.c.l.b16 %v84
    %v149 = vpack.c.b16 %v118, %v117
    %v150 = vpack.c.b16 %v120, %v119
    %v151 = vpack.c.b16 %v122, %v121
    %v152 = vpack.c.b16 %v124, %v123
    %v153 = vpack.c.b16 %v126, %v125
    %v154 = vpack.c.b16 %v128, %v127
    %v155 = vpack.c.b16 %v130, %v129
    %v156 = vpack.c.b16 %v132, %v131
    %v157 = vpack.c.b16 %v134, %v133
    %v158 = vpack.c.b16 %v136, %v135
    %v159 = vpack.c.b16 %v138, %v137
    %v160 = vpack.c.b16 %v140, %v139
    %v161 = vpack.c.b16 %v142, %v141
    %v162 = vpack.c.b16 %v144, %v143
    %v163 = vpack.c.b16 %v146, %v145
    %v164 = vpack.c.b16 %v148, %v147
    %181 = vmatpush.bf16.msra.mxu0 %v156
    %182 = vmatpush.bf16.msra.mxu0 %v155
    %183 = vmatpush.bf16.msra.mxu0 %v154
    %184 = vmatpush.bf16.msra.mxu0 %v153
    %185 = vmatpush.bf16.msra.mxu0 %v152
    %186 = vmatpush.bf16.msra.mxu0 %v151
    %187 = vmatpush.bf16.msra.mxu0 %v150
    %188 = vmatpush.bf16.msra.mxu0 %v149
    %189 = vmatmul.bf16.gmra.mxu0 %v51
    %v190 = vpop.f32.mrf.mxu0
    %v191 = vadd.f32 0.0, %v190
    %v192 = vpop.f32.mrf.mxu0
    %v193 = vadd.f32 0.0, %v192
    %194 = vdwg.mxu0
    %195 = vmatpush.bf16.msra.mxu0 %v164
    %196 = vmatpush.bf16.msra.mxu0 %v163
    %197 = vmatpush.bf16.msra.mxu0 %v162
    %198 = vmatpush.bf16.msra.mxu0 %v161
    %199 = vmatpush.bf16.msra.mxu0 %v160
    %200 = vmatpush.bf16.msra.mxu0 %v159
    %201 = vmatpush.bf16.msra.mxu0 %v158
    %202 = vmatpush.bf16.msra.mxu0 %v157
    %203 = vmatmul.bf16.gmra.mxu0 %v52
    %v204 = vpop.f32.mrf.mxu0
    %v205 = vadd.f32 %v191, %v204
    %v206 = vpop.f32.mrf.mxu0
    %v207 = vadd.f32 %v193, %v206
    %208 = vdwg.mxu0
    %v209 = vadd.f32 %v45, %v205
    %v210 = vadd.f32 %v46, %v207
    %211 = vst [vmem:[#allocation2] sm:$0xff] %v209
    %212 = vst [vmem:[#allocation2 + $0x8] sm:$0xff] %v210
    // Predicated region
    $region34: #{transformer_decoder.20} parent=1 // pred_check
      %p213 = pneg %p39
    $region35: #{transformer_decoder.20} parent=1 // pred_check_branch
      %215 = sbr.rel (%p213) target = $region37
    $region36: #{transformer_decoder.20} parent=1 // pred_region
      %v216 = vld [vmem:[#allocation2] sm:$0xff]
      %v217 = vld [vmem:[#allocation2 + $0x8] sm:$0xff]
      %v218 = vld [vmem:[%s2] sm:$0x1]
      %v220 = vperm.slane %v218, 0
      %v222 = vadd.f32 %v216, %v220
      %v223 = vadd.f32 %v217, %v220
      %v224 = vld [vmem:[%s3] sm:$0xff]
      %v225 = vld [vmem:[%s3 + $0x8] sm:$0xff]
      %v226 = vadd.f32 %v222, %v224
      %v227 = vadd.f32 %v223, %v225
      %228 = vadd.xlane.f32.xlu0 %v226
      %v229 = vpop.xlane.xlu0 %228
      %230 = vadd.xlane.f32.xlu0 %v227
      %v231 = vpop.xlane.xlu0 %230
      %v232 = vrcp.pop 128.0
      %v233 = vmul.f32 128.0, %v232
      %v234 = vsub.f32 1.0, %v233
      %v235 = vmul.f32 %v232, %v234
      %v236 = vadd.f32 %v232, %v235
      %vm237 = vweird.f32 %v232
      %v238 = vsel %vm237, %v232, %v236
      %v239 = vmul.f32 %v229, %v238
      %v240 = vmul.f32 %v231, %v238
      %v241 = vsub.f32 %v226, %v239
      %v242 = vsub.f32 %v227, %v240
      %v243 = vmul.f32 %v241, %v241
      %v244 = vmul.f32 %v242, %v242
      %245 = vadd.xlane.f32.xlu0 %v243
      %v246 = vpop.xlane.xlu0 %245
      %247 = vadd.xlane.f32.xlu0 %v244
      %v248 = vpop.xlane.xlu0 %247
      %v249 = vmul.f32 %v246, %v238
      %v250 = vmul.f32 %v248, %v238
      %v251 = vadd.f32 %v249, 1e-05
      %v252 = vadd.f32 %v250, 1e-05
      %v253 = vrsqrt.pop %v251
      %v254 = vmul.f32 %v253, %v251
      %v255 = vmul.f32 %v254, %v253
      %v256 = vmul.f32 0.5, %v255
      %v257 = vsub.f32 1.5, %v256
      %v258 = vmul.f32 %v253, %v257
      %vm259 = vweird.f32 %v251
      %vm260 = vweird.f32 %v253
      %vm261 = vmor %vm259, %vm260
      %v262 = vsel %vm261, %v253, %v258
      %v263 = vrsqrt.pop %v252
      %v264 = vmul.f32 %v263, %v252
      %v265 = vmul.f32 %v264, %v263
      %v266 = vmul.f32 0.5, %v265
      %v267 = vsub.f32 1.5, %v266
      %v268 = vmul.f32 %v263, %v267
      %vm269 = vweird.f32 %v252
      %vm270 = vweird.f32 %v263
      %vm271 = vmor %vm269, %vm270
      %v272 = vsel %vm271, %v263, %v268
      %v273 = vmul.f32 %v241, %v262
      %v274 = vmul.f32 %v242, %v272
      %v275 = vld [vmem:[%s4] sm:$0x1]
      %v277 = vperm.slane %v275, 0
      %v279 = vmul.f32 %v273, %v277
      %v280 = vmul.f32 %v274, %v277
      %v281 = vld [vmem:[%s5] sm:$0x1]
      %v283 = vperm.slane %v281, 0
      %v285 = vadd.f32 %v279, %v283
      %v286 = vadd.f32 %v280, %v283
      %287 = vst [vmem:[%s6] sm:$0xff] %v285
      %288 = vst [vmem:[%s6 + $0x8] sm:$0xff] %v286
    $region37: #{transformer_decoder.20} parent=1 // pred_fallthru
      _
    // Predicated region
    $region38: #{transformer_decoder.20} parent=1 // pred_check
      _
    $region39: #{transformer_decoder.20} parent=1 // pred_check_branch
      %290 = sbr.rel (0) target = $region41
    $region40: #{transformer_decoder.20} parent=1 // pred_region
      _
    $region41: #{transformer_decoder.20} parent=1 // pred_fallthru
      _
    // Predicated region
    $region42: #{transformer_decoder.20} parent=1 // pred_check
      _
    $region43: #{transformer_decoder.20} parent=1 // pred_check_branch
      %292 = sbr.rel (0) target = $region45
    $region44: #{transformer_decoder.20} parent=1 // pred_region
      _
    $region45: #{transformer_decoder.20} parent=1 // pred_fallthru
      _
    %293 = vsyncpa [#allocation4], 1

</llo_original>
